<compile_context>
chip_gen: v7x
topology: tpu7x:2x2x1
jax: 0.10.0
libtpu: 0.0.40
codegen_flags: <defaults>
</compile_context>

<pallas_src>
import math
import functools

import jax
import jax.numpy as jnp
from jax import lax
from jax.experimental import pallas as pl
from jax.experimental.pallas import tpu as pltpu


# ----------------------------------------------------------------------------
# Kernel
# ----------------------------------------------------------------------------
def _layernorm(v, alpha, beta):
    # Reproduces LayerNormalization.forward: torch.std is *unbiased* (N-1),
    # epsilon is added to sigma (not to the variance).
    h = v.shape[-1]
    mean = jnp.mean(v, axis=-1, keepdims=True)
    var = jnp.sum((v - mean) ** 2, axis=-1, keepdims=True) * (1.0 / (h - 1))
    sigma = jnp.sqrt(var)
    inv = pl.reciprocal(sigma + 1e-8, approx=True)        # EUP, off the VPU path
    return alpha * ((v - mean) * inv) + beta


def encoder_kernel(
    x_ref, kbias_ref, qkeep_ref,
    a1_ref, b1_ref, a2_ref, b2_ref,
    wqkv_ref, bqkv_ref, wo_ref, bo_ref,
    w1_ref, bf1_ref, w2_ref, bf2_ref,
    out_ref,
    *, num_heads,
):
    l = pl.program_id(1)

    # Layer 0 of each batch element: seed the resident activation from the
    # input block.  out_ref keeps the same block index across the (arbitrary)
    # layer axis, so it stays in VMEM and carries x between layer iterations.
    @pl.when(l == 0)
    def _():
        out_ref[0] = x_ref[0]

    x = out_ref[0]                                # (S, H) float32 carry
    S, H = x.shape
    hd = H // num_heads

    k_bias = kbias_ref[0]                         # (1, S)  = mask * -1e32
    q_keep = qkeep_ref[0]                         # (S, 1)  = 1 - mask

    # ---- sublayer 0: pre-LayerNorm multi-head self-attention ----
    xn = _layernorm(x, a1_ref[...], b1_ref[...]).astype(jnp.bfloat16)
    # Fused Q|K|V projection; the 1/sqrt(H) scale is pre-folded into the Q
    # columns of wqkv/bqkv by the wrapper.
    qkv = jnp.dot(xn, wqkv_ref[0],
                  preferred_element_type=jnp.float32) + bqkv_ref[0]   # (S, 3H)

    acc = jnp.zeros((S, H), jnp.float32)
    for h in range(num_heads):                    # static head loop
        qh = qkv[:, h * hd:(h + 1) * hd].astype(jnp.bfloat16)
        kh = qkv[:, H + h * hd:H + (h + 1) * hd].astype(jnp.bfloat16)
        vh = qkv[:, 2 * H + h * hd:2 * H + (h + 1) * hd].astype(jnp.bfloat16)

        scores = lax.dot_general(
            qh, kh, (((1,), (1,)), ((), ())),
            preferred_element_type=jnp.float32) + k_bias              # (S, S)
        m = jnp.max(scores, axis=-1, keepdims=True)
        e = jnp.exp(scores - m)
        p = e * pl.reciprocal(jnp.sum(e, axis=-1, keepdims=True), approx=True)

        oh = jnp.dot(p.astype(jnp.bfloat16), vh,
                     preferred_element_type=jnp.float32)              # (S, hd)
        # Contract directly against this head's slab of W_out and accumulate:
        # replaces the per-head concatenate + one big (S,H)@(H,H) matmul.
        acc = acc + jnp.dot(oh.astype(jnp.bfloat16), wo_ref[0, h],
                            preferred_element_type=jnp.float32)       # (S, H)

    # Query-mask zeroes whole query rows of the attention output (equivalent
    # to masking the attention weights, by row-linearity); W_out bias after.
    attn = acc * q_keep + bo_ref[0]
    x = x + attn

    # ---- sublayer 1: pre-LayerNorm position-wise feed forward ----
    xn2 = _layernorm(x, a2_ref[...], b2_ref[...]).astype(jnp.bfloat16)
    h1 = jnp.maximum(
        jnp.dot(xn2, w1_ref[0], preferred_element_type=jnp.float32) + bf1_ref[0],
        0.0)
    ff = jnp.dot(h1.astype(jnp.bfloat16), w2_ref[0],
                 preferred_element_type=jnp.float32) + bf2_ref[0]
    out_ref[0] = x + ff


# ----------------------------------------------------------------------------
# Wrapper (pallas_call plumbing) — single call for the whole encoder stack
# ----------------------------------------------------------------------------
def positional_encoding(seq_len, dim):
    position = jnp.arange(seq_len, dtype=jnp.float32)[:, None]
    div_term = jnp.exp(jnp.arange(0, dim, 2, dtype=jnp.float32)
                       * -(math.log(10000.0) / dim))
    pe = jnp.zeros((seq_len, dim), dtype=jnp.float32)
    pe = pe.at[:, 0::2].set(jnp.sin(position * div_term))
    pe = pe.at[:, 1::2].set(jnp.cos(position * div_term))
    return pe


def encoder_forward(x, mask, params, num_heads):
    B, S, H = x.shape
    layers = params["layers"]
    L = len(layers)
    d_ff = layers[0]["w1t"].shape[1]
    hd = H // num_heads

    # Positional encoding is trivial glue (rate=1, eval dropout).
    x = x + positional_encoding(S, H)[None, :, :]

    mf = mask.astype(jnp.float32)
    kbias = (mf * -1e32)[:, None, :]                  # (B, 1, S) additive key mask
    qkeep = (1.0 - mf)[:, :, None]                    # (B, S, 1) multiplicative query mask

    # Stack per-layer weights with a leading layer axis; fuse Q|K|V; fold the
    # 1/sqrt(hidden_dim) attention scale into the Q weights; ship as bf16.
    scale = 1.0 / math.sqrt(H)
    wqkv = jnp.stack([jnp.concatenate(
        [lp["wqt"] * scale, lp["wkt"], lp["wvt"]], axis=1) for lp in layers]
    ).astype(jnp.bfloat16)                                          # (L, H, 3H)
    bqkv = jnp.stack([jnp.concatenate(
        [lp["bq"] * scale, lp["bk"], lp["bv"]], axis=1) for lp in layers])  # (L, 1, 3H)
    wo = jnp.stack([lp["wot"].reshape(num_heads, hd, H) for lp in layers]
                   ).astype(jnp.bfloat16)                           # (L, nh, hd, H)
    bo = jnp.stack([lp["bo"] for lp in layers])                     # (L, 1, H)
    w1 = jnp.stack([lp["w1t"] for lp in layers]).astype(jnp.bfloat16)   # (L, H, d_ff)
    bf1 = jnp.stack([lp["bf1"] for lp in layers])                   # (L, 1, d_ff)
    w2 = jnp.stack([lp["w2t"] for lp in layers]).astype(jnp.bfloat16)   # (L, d_ff, H)
    bf2 = jnp.stack([lp["bf2"] for lp in layers])                   # (L, 1, H)

    def per_batch(shape):
        return pl.BlockSpec(shape, lambda b, l: (b,) + (0,) * (len(shape) - 1))

    def per_layer(shape):
        return pl.BlockSpec(shape, lambda b, l: (l,) + (0,) * (len(shape) - 1))

    def shared(shape):
        return pl.BlockSpec(shape, lambda b, l: (0,) * len(shape))

    in_specs = [
        per_batch((1, S, H)),                       # x
        per_batch((1, 1, S)),                       # key-mask bias
        per_batch((1, S, 1)),                       # query keep mask
        shared((1, H)), shared((1, H)),             # ln1 alpha/beta (shared across layers)
        shared((1, H)), shared((1, H)),             # ln2 alpha/beta
        per_layer((1, H, 3 * H)), per_layer((1, 1, 3 * H)),        # Wqkv, bqkv
        per_layer((1, num_heads, hd, H)), per_layer((1, 1, H)),    # Wo (per head), bo
        per_layer((1, H, d_ff)), per_layer((1, 1, d_ff)),          # W1, b1
        per_layer((1, d_ff, H)), per_layer((1, 1, H)),             # W2, b2
    ]
    out_specs = pl.BlockSpec((1, S, H), lambda b, l: (b, 0, 0))

    kernel = functools.partial(encoder_kernel, num_heads=num_heads)
    return pl.pallas_call(
        kernel,
        out_shape=jax.ShapeDtypeStruct((B, S, H), jnp.float32),
        grid=(B, L),
        in_specs=in_specs,
        out_specs=out_specs,
        compiler_params=pltpu.CompilerParams(
            dimension_semantics=("parallel", "arbitrary"),
            vmem_limit_bytes=64 * 1024 * 1024,
        ),
    )(x, kbias, qkeep,
      params["ln1_a"], params["ln1_b"], params["ln2_a"], params["ln2_b"],
      wqkv, bqkv, wo, bo, w1, bf1, w2, bf2)


# ----------------------------------------------------------------------------
# Pure-JAX f32 reference (mirrors the PyTorch forward) for validation
# ----------------------------------------------------------------------------
def _ref_layernorm(v, alpha, beta):
    H = v.shape[-1]
    mean = jnp.mean(v, -1, keepdims=True)
    sigma = jnp.sqrt(jnp.sum((v - mean) ** 2, -1, keepdims=True) / (H - 1))
    return alpha * ((v - mean) / (sigma + 1e-8)) + beta


def reference_encoder(x, mask, params, num_heads):
    B, S, H = x.shape
    hd = H // num_heads
    x = x + positional_encoding(S, H)[None, :, :]
    mf = mask.astype(jnp.float32)
    a1, b1 = params["ln1_a"], params["ln1_b"]
    a2, b2 = params["ln2_a"], params["ln2_b"]
    for lp in params["layers"]:
        xn = _ref_layernorm(x, a1, b1)
        q = xn @ lp["wqt"] + lp["bq"]
        k = xn @ lp["wkt"] + lp["bk"]
        v = xn @ lp["wvt"] + lp["bv"]
        qh = q.reshape(B, S, num_heads, hd).transpose(0, 2, 1, 3)
        kh = k.reshape(B, S, num_heads, hd).transpose(0, 2, 1, 3)
        vh = v.reshape(B, S, num_heads, hd).transpose(0, 2, 1, 3)
        scores = jnp.einsum("bhqd,bhkd->bhqk", qh, kh) / math.sqrt(H)
        scores = scores + (mf * -1e32)[:, None, None, :]
        p = jax.nn.softmax(scores, axis=-1)
        p = p * (1.0 - mf)[:, None, :, None]
        attn = jnp.einsum("bhqk,bhkd->bhqd", p, vh).transpose(0, 2, 1, 3).reshape(B, S, H)
        x = x + (attn @ lp["wot"] + lp["bo"])
        xn = _ref_layernorm(x, a2, b2)
        h1 = jnp.maximum(xn @ lp["w1t"] + lp["bf1"], 0.0)
        x = x + (h1 @ lp["w2t"] + lp["bf2"])
    return x


# ----------------------------------------------------------------------------
# Deterministic parameter init (shapes from Encoder.__init__)
# ----------------------------------------------------------------------------
def init_linear(key, d_in, d_out):
    k1, k2 = jax.random.split(key)
    bound = 1.0 / math.sqrt(d_in)
    wt = jax.random.uniform(k1, (d_in, d_out), jnp.float32, -bound, bound)
    b = jax.random.uniform(k2, (1, d_out), jnp.float32, -bound, bound)
    return wt, b


def init_params(key, hidden_dim, d_ff, num_layers):
    layers = []
    for _ in range(num_layers):
        keys = jax.random.split(key, 7)
        key = keys[0]
        wqt, bq = init_linear(keys[1], hidden_dim, hidden_dim)
        wkt, bk = init_linear(keys[2], hidden_dim, hidden_dim)
        wvt, bv = init_linear(keys[3], hidden_dim, hidden_dim)
        wot, bo = init_linear(keys[4], hidden_dim, hidden_dim)
        w1t, bf1 = init_linear(keys[5], hidden_dim, d_ff)
        w2t, bf2 = init_linear(keys[6], d_ff, hidden_dim)
        layers.append(dict(wqt=wqt, bq=bq, wkt=wkt, bk=bk, wvt=wvt, bv=bv,
                           wot=wot, bo=bo, w1t=w1t, bf1=bf1, w2t=w2t, bf2=bf2))
    # SubLayerConnection layernorms: only 2, shared across layers (as in module)
    return dict(
        ln1_a=jnp.ones((1, hidden_dim), jnp.float32),
        ln1_b=jnp.zeros((1, hidden_dim), jnp.float32),
        ln2_a=jnp.ones((1, hidden_dim), jnp.float32),
        ln2_b=jnp.zeros((1, hidden_dim), jnp.float32),
        layers=layers,
    )


# ----------------------------------------------------------------------------
if __name__ == "__main__":
    B, S, H, D_FF, NUM_HEADS, NUM_LAYERS = 2, 8, 32, 64, 4, 2

    root = jax.random.PRNGKey(0)
    kp, kx = jax.random.split(root)
    params = init_params(kp, H, D_FF, NUM_LAYERS)
    x = jax.random.normal(kx, (B, S, H), jnp.float32)
    # mask: True == padding position (batch 1 has its last two tokens padded)
    mask = jnp.array([[False] * S,
                      [False] * (S - 2) + [True, True]], dtype=jnp.bool_)

    out = encoder_forward(x, mask, params, NUM_HEADS)
    out = jax.block_until_ready(out)

    with jax.default_matmul_precision("highest"):
        ref = reference_encoder(x, mask, params, NUM_HEADS)
    ref = jax.block_until_ready(ref)

    assert out.shape == (B, S, H)
    assert bool(jnp.all(jnp.isfinite(out)))
    # Kernel uses bf16 MXU operands + approx reciprocals, so validate with a
    # scale-normalized error bound against the f32 reference.
    max_err = float(jnp.max(jnp.abs(out - ref)))
    ref_scale = float(jnp.max(jnp.abs(ref)))
    assert max_err / ref_scale < 4e-2, \
        f"normalized max error too large: {max_err} / {ref_scale}"

    print("KERNEL_OK")
</pallas_src>

<mosaic_0001>
module attributes {stable_mosaic.version = 11 : i64} {
  func.func @encoder_kernel(%arg0: i32, %arg1: i32, %arg2: memref<1x8x32xf32, #tpu.memory_space<vmem>>, %arg3: memref<1x1x8xf32, #tpu.memory_space<vmem>>, %arg4: memref<1x8x1xf32, #tpu.memory_space<vmem>>, %arg5: memref<1x32xf32, #tpu.memory_space<vmem>>, %arg6: memref<1x32xf32, #tpu.memory_space<vmem>>, %arg7: memref<1x32xf32, #tpu.memory_space<vmem>>, %arg8: memref<1x32xf32, #tpu.memory_space<vmem>>, %arg9: memref<1x32x96xbf16, #tpu.memory_space<vmem>>, %arg10: memref<1x1x96xf32, #tpu.memory_space<vmem>>, %arg11: memref<1x4x8x32xbf16, #tpu.memory_space<vmem>>, %arg12: memref<1x1x32xf32, #tpu.memory_space<vmem>>, %arg13: memref<1x32x64xbf16, #tpu.memory_space<vmem>>, %arg14: memref<1x1x64xf32, #tpu.memory_space<vmem>>, %arg15: memref<1x64x32xbf16, #tpu.memory_space<vmem>>, %arg16: memref<1x1x32xf32, #tpu.memory_space<vmem>>, %arg17: memref<1x8x32xf32, #tpu.memory_space<vmem>>) attributes {dimension_semantics = [#tpu.dimension_semantics<parallel>, #tpu.dimension_semantics<arbitrary>], iteration_bounds = array<i64: 2, 2>, scalar_prefetch = 0 : i64, scratch_operands = 0 : i64, tpu.core_type = #tpu.core_type<tc>, window_params = [{transform_indices = @transform_0, window_bounds = array<i64: 1, 8, 32>}, {transform_indices = @transform_1, window_bounds = array<i64: 1, 1, 8>}, {transform_indices = @transform_2, window_bounds = array<i64: 1, 8, 1>}, {pipeline_mode = #tpu.pipeline_mode<synchronous>, transform_indices = @transform_3, window_bounds = array<i64: 1, 32>}, {pipeline_mode = #tpu.pipeline_mode<synchronous>, transform_indices = @transform_4, window_bounds = array<i64: 1, 32>}, {pipeline_mode = #tpu.pipeline_mode<synchronous>, transform_indices = @transform_5, window_bounds = array<i64: 1, 32>}, {pipeline_mode = #tpu.pipeline_mode<synchronous>, transform_indices = @transform_6, window_bounds = array<i64: 1, 32>}, {transform_indices = @transform_7, window_bounds = array<i64: 1, 32, 96>}, {transform_indices = @transform_8, window_bounds = array<i64: 1, 1, 96>}, {transform_indices = @transform_9, window_bounds = array<i64: 1, 4, 8, 32>}, {transform_indices = @transform_10, window_bounds = array<i64: 1, 1, 32>}, {transform_indices = @transform_11, window_bounds = array<i64: 1, 32, 64>}, {transform_indices = @transform_12, window_bounds = array<i64: 1, 1, 64>}, {transform_indices = @transform_13, window_bounds = array<i64: 1, 64, 32>}, {transform_indices = @transform_14, window_bounds = array<i64: 1, 1, 32>}, {transform_indices = @transform_15, window_bounds = array<i64: 1, 8, 32>}]} {
    %c0_i32 = arith.constant 0 : i32
    %0 = arith.cmpi eq, %arg1, %c0_i32 : i32
    %1 = arith.extui %0 : i1 to i32
    %c0_i32_0 = arith.constant 0 : i32
    %2 = arith.cmpi ne, %1, %c0_i32_0 : i32
    scf.if %2 {
      %c0_88 = arith.constant 0 : index
      %c0_89 = arith.constant 0 : index
      %c0_90 = arith.constant 0 : index
      %201 = vector.load %arg2[%c0_88, %c0_89, %c0_90] : memref<1x8x32xf32, #tpu.memory_space<vmem>>, vector<1x8x32xf32>
      %202 = vector.shape_cast %201 : vector<1x8x32xf32> to vector<8x32xf32>
      %c0_91 = arith.constant 0 : index
      %c0_92 = arith.constant 0 : index
      %c0_93 = arith.constant 0 : index
      %203 = vector.load %arg17[%c0_91, %c0_92, %c0_93] : memref<1x8x32xf32, #tpu.memory_space<vmem>>, vector<1x8x32xf32>
      %204 = vector.shape_cast %203 : vector<1x8x32xf32> to vector<8x32xf32>
      %205 = vector.shape_cast %202 : vector<8x32xf32> to vector<1x8x32xf32>
      tpu.vector_store %arg17[%c0_91, %c0_92, %c0_93], %205 {strides = array<i32>} : memref<1x8x32xf32, #tpu.memory_space<vmem>>, vector<1x8x32xf32>,
    } else {
    }
    %c0 = arith.constant 0 : index
    %c0_1 = arith.constant 0 : index
    %c0_2 = arith.constant 0 : index
    %3 = vector.load %arg17[%c0, %c0_1, %c0_2] : memref<1x8x32xf32, #tpu.memory_space<vmem>>, vector<1x8x32xf32>
    %4 = vector.shape_cast %3 : vector<1x8x32xf32> to vector<8x32xf32>
    %c0_3 = arith.constant 0 : index
    %c0_4 = arith.constant 0 : index
    %c0_5 = arith.constant 0 : index
    %5 = vector.load %arg3[%c0_3, %c0_4, %c0_5] : memref<1x1x8xf32, #tpu.memory_space<vmem>>, vector<1x1x8xf32>
    %6 = vector.shape_cast %5 : vector<1x1x8xf32> to vector<1x8xf32>
    %c0_6 = arith.constant 0 : index
    %c0_7 = arith.constant 0 : index
    %c0_8 = arith.constant 0 : index
    %7 = vector.load %arg4[%c0_6, %c0_7, %c0_8] : memref<1x8x1xf32, #tpu.memory_space<vmem>>, vector<1x8x1xf32>
    %8 = vector.shape_cast %7 : vector<1x8x1xf32> to vector<8x1xf32>
    %c0_9 = arith.constant 0 : index
    %c0_10 = arith.constant 0 : index
    %9 = vector.load %arg5[%c0_9, %c0_10] : memref<1x32xf32, #tpu.memory_space<vmem>>, vector<1x32xf32>
    %c0_11 = arith.constant 0 : index
    %c0_12 = arith.constant 0 : index
    %10 = vector.load %arg6[%c0_11, %c0_12] : memref<1x32xf32, #tpu.memory_space<vmem>>, vector<1x32xf32>
    %cst = arith.constant dense<0.000000e+00> : vector<8xf32>
    %11 = vector.multi_reduction <add>, %4, %cst [1] : vector<8x32xf32> to vector<8xf32>
    %12 = vector.shape_cast %11 : vector<8xf32> to vector<8x1xf32>
    %cst_13 = arith.constant 3.200000e+01 : f32
    %13 = vector.broadcast %cst_13 : f32 to vector<8x1xf32>
    %14 = arith.divf %12, %13 : vector<8x1xf32>
    %15 = vector.broadcast %14 : vector<8x1xf32> to vector<8x32xf32>
    %16 = arith.subf %4, %15 : vector<8x32xf32>
    %17 = arith.mulf %16, %16 : vector<8x32xf32>
    %cst_14 = arith.constant dense<0.000000e+00> : vector<8xf32>
    %18 = vector.multi_reduction <add>, %17, %cst_14 [1] : vector<8x32xf32> to vector<8xf32>
    %19 = vector.shape_cast %18 : vector<8xf32> to vector<8x1xf32>
    %cst_15 = arith.constant 0.0322580636 : f32
    %20 = vector.broadcast %cst_15 : f32 to vector<8x1xf32>
    %21 = arith.mulf %19, %20 : vector<8x1xf32>
    %22 = math.sqrt %21 : vector<8x1xf32>
    %cst_16 = arith.constant 9.99999993E-9 : f32
    %23 = vector.broadcast %cst_16 : f32 to vector<8x1xf32>
    %24 = arith.addf %22, %23 : vector<8x1xf32>
    %25 = tpu.reciprocal %24 {approx = true} : vector<8x1xf32> -> vector<8x1xf32>
    %26 = vector.broadcast %14 : vector<8x1xf32> to vector<8x32xf32>
    %27 = arith.subf %4, %26 : vector<8x32xf32>
    %28 = vector.broadcast %25 : vector<8x1xf32> to vector<8x32xf32>
    %29 = arith.mulf %27, %28 : vector<8x32xf32>
    %30 = vector.broadcast %9 : vector<1x32xf32> to vector<8x32xf32>
    %31 = arith.mulf %30, %29 : vector<8x32xf32>
    %32 = vector.broadcast %10 : vector<1x32xf32> to vector<8x32xf32>
    %33 = arith.addf %31, %32 : vector<8x32xf32>
    %34 = arith.truncf %33 : vector<8x32xf32> to vector<8x32xbf16>
    %c0_17 = arith.constant 0 : index
    %c0_18 = arith.constant 0 : index
    %c0_19 = arith.constant 0 : index
    %35 = vector.load %arg9[%c0_17, %c0_18, %c0_19] : memref<1x32x96xbf16, #tpu.memory_space<vmem>>, vector<1x32x96xbf16>
    %36 = vector.shape_cast %35 : vector<1x32x96xbf16> to vector<32x96xbf16>
    %cst_20 = arith.constant dense<0.000000e+00> : vector<8x96xf32>
    %37 = tpu.matmul %34, %36, %cst_20 {dimension_numbers = #tpu.dot_dimension_numbers<[1], [0], [0], [1], [0, 0, 1, 1], [], []>} : vector<8x32xbf16>, vector<32x96xbf16>, vector<8x96xf32> -> vector<8x96xf32>
    %c0_21 = arith.constant 0 : index
    %c0_22 = arith.constant 0 : index
    %c0_23 = arith.constant 0 : index
    %38 = vector.load %arg10[%c0_21, %c0_22, %c0_23] : memref<1x1x96xf32, #tpu.memory_space<vmem>>, vector<1x1x96xf32>
    %39 = vector.shape_cast %38 : vector<1x1x96xf32> to vector<1x96xf32>
    %40 = vector.broadcast %39 : vector<1x96xf32> to vector<8x96xf32>
    %41 = arith.addf %37, %40 : vector<8x96xf32>
    %cst_24 = arith.constant 0.000000e+00 : f32
    %42 = vector.broadcast %cst_24 : f32 to vector<8x32xf32>
    %43 = vector.extract_strided_slice %41 {offsets = [0, 0], sizes = [8, 8], strides = [1, 1]} : vector<8x96xf32> to vector<8x8xf32>
    %44 = arith.truncf %43 : vector<8x8xf32> to vector<8x8xbf16>
    %45 = vector.extract_strided_slice %41 {offsets = [0, 32], sizes = [8, 8], strides = [1, 1]} : vector<8x96xf32> to vector<8x8xf32>
    %46 = arith.truncf %45 : vector<8x8xf32> to vector<8x8xbf16>
    %47 = vector.extract_strided_slice %41 {offsets = [0, 64], sizes = [8, 8], strides = [1, 1]} : vector<8x96xf32> to vector<8x8xf32>
    %48 = arith.truncf %47 : vector<8x8xf32> to vector<8x8xbf16>
    %cst_25 = arith.constant dense<0.000000e+00> : vector<8x8xf32>
    %49 = tpu.matmul %44, %46, %cst_25 {dimension_numbers = #tpu.dot_dimension_numbers<[1], [1], [0], [0], [0, 0, 1, 0], [], []>} : vector<8x8xbf16>, vector<8x8xbf16>, vector<8x8xf32> -> vector<8x8xf32>
    %50 = vector.broadcast %6 : vector<1x8xf32> to vector<8x8xf32>
    %51 = arith.addf %49, %50 : vector<8x8xf32>
    %cst_26 = arith.constant dense<0xFF800000> : vector<8xf32>
    %52 = vector.multi_reduction <maximumf>, %51, %cst_26 [1] : vector<8x8xf32> to vector<8xf32>
    %53 = vector.shape_cast %52 : vector<8xf32> to vector<8x1xf32>
    %54 = vector.broadcast %53 : vector<8x1xf32> to vector<8x8xf32>
    %55 = arith.subf %51, %54 : vector<8x8xf32>
    %56 = math.exp %55 : vector<8x8xf32>
    %cst_27 = arith.constant dense<0.000000e+00> : vector<8xf32>
    %57 = vector.multi_reduction <add>, %56, %cst_27 [1] : vector<8x8xf32> to vector<8xf32>
    %58 = vector.shape_cast %57 : vector<8xf32> to vector<8x1xf32>
    %59 = tpu.reciprocal %58 {approx = true} : vector<8x1xf32> -> vector<8x1xf32>
    %60 = vector.broadcast %59 : vector<8x1xf32> to vector<8x8xf32>
    %61 = arith.mulf %56, %60 : vector<8x8xf32>
    %62 = arith.truncf %61 : vector<8x8xf32> to vector<8x8xbf16>
    %cst_28 = arith.constant dense<0.000000e+00> : vector<8x8xf32>
    %63 = tpu.matmul %62, %48, %cst_28 {dimension_numbers = #tpu.dot_dimension_numbers<[1], [0], [0], [1], [0, 0, 1, 1], [], []>} : vector<8x8xbf16>, vector<8x8xbf16>, vector<8x8xf32> -> vector<8x8xf32>
    %64 = arith.truncf %63 : vector<8x8xf32> to vector<8x8xbf16>
    %c0_29 = arith.constant 0 : index
    %c0_30 = arith.constant 0 : index
    %c0_31 = arith.constant 0 : index
    %c0_32 = arith.constant 0 : index
    %65 = vector.load %arg11[%c0_29, %c0_30, %c0_31, %c0_32] : memref<1x4x8x32xbf16, #tpu.memory_space<vmem>>, vector<1x1x8x32xbf16>
    %66 = vector.shape_cast %65 : vector<1x1x8x32xbf16> to vector<8x32xbf16>
    %cst_33 = arith.constant dense<0.000000e+00> : vector<8x32xf32>
    %67 = tpu.matmul %64, %66, %cst_33 {dimension_numbers = #tpu.dot_dimension_numbers<[1], [0], [0], [1], [0, 0, 1, 1], [], []>} : vector<8x8xbf16>, vector<8x32xbf16>, vector<8x32xf32> -> vector<8x32xf32>
    %68 = arith.addf %42, %67 : vector<8x32xf32>
    %69 = vector.extract_strided_slice %41 {offsets = [0, 8], sizes = [8, 8], strides = [1, 1]} : vector<8x96xf32> to vector<8x8xf32>
    %70 = arith.truncf %69 : vector<8x8xf32> to vector<8x8xbf16>
    %71 = vector.extract_strided_slice %41 {offsets = [0, 40], sizes = [8, 8], strides = [1, 1]} : vector<8x96xf32> to vector<8x8xf32>
    %72 = arith.truncf %71 : vector<8x8xf32> to vector<8x8xbf16>
    %73 = vector.extract_strided_slice %41 {offsets = [0, 72], sizes = [8, 8], strides = [1, 1]} : vector<8x96xf32> to vector<8x8xf32>
    %74 = arith.truncf %73 : vector<8x8xf32> to vector<8x8xbf16>
    %cst_34 = arith.constant dense<0.000000e+00> : vector<8x8xf32>
    %75 = tpu.matmul %70, %72, %cst_34 {dimension_numbers = #tpu.dot_dimension_numbers<[1], [1], [0], [0], [0, 0, 1, 0], [], []>} : vector<8x8xbf16>, vector<8x8xbf16>, vector<8x8xf32> -> vector<8x8xf32>
    %76 = vector.broadcast %6 : vector<1x8xf32> to vector<8x8xf32>
    %77 = arith.addf %75, %76 : vector<8x8xf32>
    %cst_35 = arith.constant dense<0xFF800000> : vector<8xf32>
    %78 = vector.multi_reduction <maximumf>, %77, %cst_35 [1] : vector<8x8xf32> to vector<8xf32>
    %79 = vector.shape_cast %78 : vector<8xf32> to vector<8x1xf32>
    %80 = vector.broadcast %79 : vector<8x1xf32> to vector<8x8xf32>
    %81 = arith.subf %77, %80 : vector<8x8xf32>
    %82 = math.exp %81 : vector<8x8xf32>
    %cst_36 = arith.constant dense<0.000000e+00> : vector<8xf32>
    %83 = vector.multi_reduction <add>, %82, %cst_36 [1] : vector<8x8xf32> to vector<8xf32>
    %84 = vector.shape_cast %83 : vector<8xf32> to vector<8x1xf32>
    %85 = tpu.reciprocal %84 {approx = true} : vector<8x1xf32> -> vector<8x1xf32>
    %86 = vector.broadcast %85 : vector<8x1xf32> to vector<8x8xf32>
    %87 = arith.mulf %82, %86 : vector<8x8xf32>
    %88 = arith.truncf %87 : vector<8x8xf32> to vector<8x8xbf16>
    %cst_37 = arith.constant dense<0.000000e+00> : vector<8x8xf32>
    %89 = tpu.matmul %88, %74, %cst_37 {dimension_numbers = #tpu.dot_dimension_numbers<[1], [0], [0], [1], [0, 0, 1, 1], [], []>} : vector<8x8xbf16>, vector<8x8xbf16>, vector<8x8xf32> -> vector<8x8xf32>
    %90 = arith.truncf %89 : vector<8x8xf32> to vector<8x8xbf16>
    %c0_38 = arith.constant 0 : index
    %c1 = arith.constant 1 : index
    %c0_39 = arith.constant 0 : index
    %c0_40 = arith.constant 0 : index
    %91 = vector.load %arg11[%c0_38, %c1, %c0_39, %c0_40] : memref<1x4x8x32xbf16, #tpu.memory_space<vmem>>, vector<1x1x8x32xbf16>
    %92 = vector.shape_cast %91 : vector<1x1x8x32xbf16> to vector<8x32xbf16>
    %cst_41 = arith.constant dense<0.000000e+00> : vector<8x32xf32>
    %93 = tpu.matmul %90, %92, %cst_41 {dimension_numbers = #tpu.dot_dimension_numbers<[1], [0], [0], [1], [0, 0, 1, 1], [], []>} : vector<8x8xbf16>, vector<8x32xbf16>, vector<8x32xf32> -> vector<8x32xf32>
    %94 = arith.addf %68, %93 : vector<8x32xf32>
    %95 = vector.extract_strided_slice %41 {offsets = [0, 16], sizes = [8, 8], strides = [1, 1]} : vector<8x96xf32> to vector<8x8xf32>
    %96 = arith.truncf %95 : vector<8x8xf32> to vector<8x8xbf16>
    %97 = vector.extract_strided_slice %41 {offsets = [0, 48], sizes = [8, 8], strides = [1, 1]} : vector<8x96xf32> to vector<8x8xf32>
    %98 = arith.truncf %97 : vector<8x8xf32> to vector<8x8xbf16>
    %99 = vector.extract_strided_slice %41 {offsets = [0, 80], sizes = [8, 8], strides = [1, 1]} : vector<8x96xf32> to vector<8x8xf32>
    %100 = arith.truncf %99 : vector<8x8xf32> to vector<8x8xbf16>
    %cst_42 = arith.constant dense<0.000000e+00> : vector<8x8xf32>
    %101 = tpu.matmul %96, %98, %cst_42 {dimension_numbers = #tpu.dot_dimension_numbers<[1], [1], [0], [0], [0, 0, 1, 0], [], []>} : vector<8x8xbf16>, vector<8x8xbf16>, vector<8x8xf32> -> vector<8x8xf32>
    %102 = vector.broadcast %6 : vector<1x8xf32> to vector<8x8xf32>
    %103 = arith.addf %101, %102 : vector<8x8xf32>
    %cst_43 = arith.constant dense<0xFF800000> : vector<8xf32>
    %104 = vector.multi_reduction <maximumf>, %103, %cst_43 [1] : vector<8x8xf32> to vector<8xf32>
    %105 = vector.shape_cast %104 : vector<8xf32> to vector<8x1xf32>
    %106 = vector.broadcast %105 : vector<8x1xf32> to vector<8x8xf32>
    %107 = arith.subf %103, %106 : vector<8x8xf32>
    %108 = math.exp %107 : vector<8x8xf32>
    %cst_44 = arith.constant dense<0.000000e+00> : vector<8xf32>
    %109 = vector.multi_reduction <add>, %108, %cst_44 [1] : vector<8x8xf32> to vector<8xf32>
    %110 = vector.shape_cast %109 : vector<8xf32> to vector<8x1xf32>
    %111 = tpu.reciprocal %110 {approx = true} : vector<8x1xf32> -> vector<8x1xf32>
    %112 = vector.broadcast %111 : vector<8x1xf32> to vector<8x8xf32>
    %113 = arith.mulf %108, %112 : vector<8x8xf32>
    %114 = arith.truncf %113 : vector<8x8xf32> to vector<8x8xbf16>
    %cst_45 = arith.constant dense<0.000000e+00> : vector<8x8xf32>
    %115 = tpu.matmul %114, %100, %cst_45 {dimension_numbers = #tpu.dot_dimension_numbers<[1], [0], [0], [1], [0, 0, 1, 1], [], []>} : vector<8x8xbf16>, vector<8x8xbf16>, vector<8x8xf32> -> vector<8x8xf32>
    %116 = arith.truncf %115 : vector<8x8xf32> to vector<8x8xbf16>
    %c0_46 = arith.constant 0 : index
    %c2 = arith.constant 2 : index
    %c0_47 = arith.constant 0 : index
    %c0_48 = arith.constant 0 : index
    %117 = vector.load %arg11[%c0_46, %c2, %c0_47, %c0_48] : memref<1x4x8x32xbf16, #tpu.memory_space<vmem>>, vector<1x1x8x32xbf16>
    %118 = vector.shape_cast %117 : vector<1x1x8x32xbf16> to vector<8x32xbf16>
    %cst_49 = arith.constant dense<0.000000e+00> : vector<8x32xf32>
    %119 = tpu.matmul %116, %118, %cst_49 {dimension_numbers = #tpu.dot_dimension_numbers<[1], [0], [0], [1], [0, 0, 1, 1], [], []>} : vector<8x8xbf16>, vector<8x32xbf16>, vector<8x32xf32> -> vector<8x32xf32>
    %120 = arith.addf %94, %119 : vector<8x32xf32>
    %121 = vector.extract_strided_slice %41 {offsets = [0, 24], sizes = [8, 8], strides = [1, 1]} : vector<8x96xf32> to vector<8x8xf32>
    %122 = arith.truncf %121 : vector<8x8xf32> to vector<8x8xbf16>
    %123 = vector.extract_strided_slice %41 {offsets = [0, 56], sizes = [8, 8], strides = [1, 1]} : vector<8x96xf32> to vector<8x8xf32>
    %124 = arith.truncf %123 : vector<8x8xf32> to vector<8x8xbf16>
    %125 = vector.extract_strided_slice %41 {offsets = [0, 88], sizes = [8, 8], strides = [1, 1]} : vector<8x96xf32> to vector<8x8xf32>
    %126 = arith.truncf %125 : vector<8x8xf32> to vector<8x8xbf16>
    %cst_50 = arith.constant dense<0.000000e+00> : vector<8x8xf32>
    %127 = tpu.matmul %122, %124, %cst_50 {dimension_numbers = #tpu.dot_dimension_numbers<[1], [1], [0], [0], [0, 0, 1, 0], [], []>} : vector<8x8xbf16>, vector<8x8xbf16>, vector<8x8xf32> -> vector<8x8xf32>
    %128 = vector.broadcast %6 : vector<1x8xf32> to vector<8x8xf32>
    %129 = arith.addf %127, %128 : vector<8x8xf32>
    %cst_51 = arith.constant dense<0xFF800000> : vector<8xf32>
    %130 = vector.multi_reduction <maximumf>, %129, %cst_51 [1] : vector<8x8xf32> to vector<8xf32>
    %131 = vector.shape_cast %130 : vector<8xf32> to vector<8x1xf32>
    %132 = vector.broadcast %131 : vector<8x1xf32> to vector<8x8xf32>
    %133 = arith.subf %129, %132 : vector<8x8xf32>
    %134 = math.exp %133 : vector<8x8xf32>
    %cst_52 = arith.constant dense<0.000000e+00> : vector<8xf32>
    %135 = vector.multi_reduction <add>, %134, %cst_52 [1] : vector<8x8xf32> to vector<8xf32>
    %136 = vector.shape_cast %135 : vector<8xf32> to vector<8x1xf32>
    %137 = tpu.reciprocal %136 {approx = true} : vector<8x1xf32> -> vector<8x1xf32>
    %138 = vector.broadcast %137 : vector<8x1xf32> to vector<8x8xf32>
    %139 = arith.mulf %134, %138 : vector<8x8xf32>
    %140 = arith.truncf %139 : vector<8x8xf32> to vector<8x8xbf16>
    %cst_53 = arith.constant dense<0.000000e+00> : vector<8x8xf32>
    %141 = tpu.matmul %140, %126, %cst_53 {dimension_numbers = #tpu.dot_dimension_numbers<[1], [0], [0], [1], [0, 0, 1, 1], [], []>} : vector<8x8xbf16>, vector<8x8xbf16>, vector<8x8xf32> -> vector<8x8xf32>
    %142 = arith.truncf %141 : vector<8x8xf32> to vector<8x8xbf16>
    %c0_54 = arith.constant 0 : index
    %c3 = arith.constant 3 : index
    %c0_55 = arith.constant 0 : index
    %c0_56 = arith.constant 0 : index
    %143 = vector.load %arg11[%c0_54, %c3, %c0_55, %c0_56] : memref<1x4x8x32xbf16, #tpu.memory_space<vmem>>, vector<1x1x8x32xbf16>
    %144 = vector.shape_cast %143 : vector<1x1x8x32xbf16> to vector<8x32xbf16>
    %cst_57 = arith.constant dense<0.000000e+00> : vector<8x32xf32>
    %145 = tpu.matmul %142, %144, %cst_57 {dimension_numbers = #tpu.dot_dimension_numbers<[1], [0], [0], [1], [0, 0, 1, 1], [], []>} : vector<8x8xbf16>, vector<8x32xbf16>, vector<8x32xf32> -> vector<8x32xf32>
    %146 = arith.addf %120, %145 : vector<8x32xf32>
    %147 = vector.broadcast %8 : vector<8x1xf32> to vector<8x32xf32>
    %148 = arith.mulf %146, %147 : vector<8x32xf32>
    %c0_58 = arith.constant 0 : index
    %c0_59 = arith.constant 0 : index
    %c0_60 = arith.constant 0 : index
    %149 = vector.load %arg12[%c0_58, %c0_59, %c0_60] : memref<1x1x32xf32, #tpu.memory_space<vmem>>, vector<1x1x32xf32>
    %150 = vector.shape_cast %149 : vector<1x1x32xf32> to vector<1x32xf32>
    %151 = vector.broadcast %150 : vector<1x32xf32> to vector<8x32xf32>
    %152 = arith.addf %148, %151 : vector<8x32xf32>
    %153 = arith.addf %4, %152 : vector<8x32xf32>
    %c0_61 = arith.constant 0 : index
    %c0_62 = arith.constant 0 : index
    %154 = vector.load %arg7[%c0_61, %c0_62] : memref<1x32xf32, #tpu.memory_space<vmem>>, vector<1x32xf32>
    %c0_63 = arith.constant 0 : index
    %c0_64 = arith.constant 0 : index
    %155 = vector.load %arg8[%c0_63, %c0_64] : memref<1x32xf32, #tpu.memory_space<vmem>>, vector<1x32xf32>
    %cst_65 = arith.constant dense<0.000000e+00> : vector<8xf32>
    %156 = vector.multi_reduction <add>, %153, %cst_65 [1] : vector<8x32xf32> to vector<8xf32>
    %157 = vector.shape_cast %156 : vector<8xf32> to vector<8x1xf32>
    %cst_66 = arith.constant 3.200000e+01 : f32
    %158 = vector.broadcast %cst_66 : f32 to vector<8x1xf32>
    %159 = arith.divf %157, %158 : vector<8x1xf32>
    %160 = vector.broadcast %159 : vector<8x1xf32> to vector<8x32xf32>
    %161 = arith.subf %153, %160 : vector<8x32xf32>
    %162 = arith.mulf %161, %161 : vector<8x32xf32>
    %cst_67 = arith.constant dense<0.000000e+00> : vector<8xf32>
    %163 = vector.multi_reduction <add>, %162, %cst_67 [1] : vector<8x32xf32> to vector<8xf32>
    %164 = vector.shape_cast %163 : vector<8xf32> to vector<8x1xf32>
    %cst_68 = arith.constant 0.0322580636 : f32
    %165 = vector.broadcast %cst_68 : f32 to vector<8x1xf32>
    %166 = arith.mulf %164, %165 : vector<8x1xf32>
    %167 = math.sqrt %166 : vector<8x1xf32>
    %cst_69 = arith.constant 9.99999993E-9 : f32
    %168 = vector.broadcast %cst_69 : f32 to vector<8x1xf32>
    %169 = arith.addf %167, %168 : vector<8x1xf32>
    %170 = tpu.reciprocal %169 {approx = true} : vector<8x1xf32> -> vector<8x1xf32>
    %171 = vector.broadcast %159 : vector<8x1xf32> to vector<8x32xf32>
    %172 = arith.subf %153, %171 : vector<8x32xf32>
    %173 = vector.broadcast %170 : vector<8x1xf32> to vector<8x32xf32>
    %174 = arith.mulf %172, %173 : vector<8x32xf32>
    %175 = vector.broadcast %154 : vector<1x32xf32> to vector<8x32xf32>
    %176 = arith.mulf %175, %174 : vector<8x32xf32>
    %177 = vector.broadcast %155 : vector<1x32xf32> to vector<8x32xf32>
    %178 = arith.addf %176, %177 : vector<8x32xf32>
    %179 = arith.truncf %178 : vector<8x32xf32> to vector<8x32xbf16>
    %c0_70 = arith.constant 0 : index
    %c0_71 = arith.constant 0 : index
    %c0_72 = arith.constant 0 : index
    %180 = vector.load %arg13[%c0_70, %c0_71, %c0_72] : memref<1x32x64xbf16, #tpu.memory_space<vmem>>, vector<1x32x64xbf16>
    %181 = vector.shape_cast %180 : vector<1x32x64xbf16> to vector<32x64xbf16>
    %cst_73 = arith.constant dense<0.000000e+00> : vector<8x64xf32>
    %182 = tpu.matmul %179, %181, %cst_73 {dimension_numbers = #tpu.dot_dimension_numbers<[1], [0], [0], [1], [0, 0, 1, 1], [], []>} : vector<8x32xbf16>, vector<32x64xbf16>, vector<8x64xf32> -> vector<8x64xf32>
    %c0_74 = arith.constant 0 : index
    %c0_75 = arith.constant 0 : index
    %c0_76 = arith.constant 0 : index
    %183 = vector.load %arg14[%c0_74, %c0_75, %c0_76] : memref<1x1x64xf32, #tpu.memory_space<vmem>>, vector<1x1x64xf32>
    %184 = vector.shape_cast %183 : vector<1x1x64xf32> to vector<1x64xf32>
    %185 = vector.broadcast %184 : vector<1x64xf32> to vector<8x64xf32>
    %186 = arith.addf %182, %185 : vector<8x64xf32>
    %cst_77 = arith.constant 0.000000e+00 : f32
    %187 = vector.broadcast %cst_77 : f32 to vector<8x64xf32>
    %188 = arith.maximumf %186, %187 : vector<8x64xf32>
    %189 = arith.truncf %188 : vector<8x64xf32> to vector<8x64xbf16>
    %c0_78 = arith.constant 0 : index
    %c0_79 = arith.constant 0 : index
    %c0_80 = arith.constant 0 : index
    %190 = vector.load %arg15[%c0_78, %c0_79, %c0_80] : memref<1x64x32xbf16, #tpu.memory_space<vmem>>, vector<1x64x32xbf16>
    %191 = vector.shape_cast %190 : vector<1x64x32xbf16> to vector<64x32xbf16>
    %cst_81 = arith.constant dense<0.000000e+00> : vector<8x32xf32>
    %192 = tpu.matmul %189, %191, %cst_81 {dimension_numbers = #tpu.dot_dimension_numbers<[1], [0], [0], [1], [0, 0, 1, 1], [], []>} : vector<8x64xbf16>, vector<64x32xbf16>, vector<8x32xf32> -> vector<8x32xf32>
    %c0_82 = arith.constant 0 : index
    %c0_83 = arith.constant 0 : index
    %c0_84 = arith.constant 0 : index
    %193 = vector.load %arg16[%c0_82, %c0_83, %c0_84] : memref<1x1x32xf32, #tpu.memory_space<vmem>>, vector<1x1x32xf32>
    %194 = vector.shape_cast %193 : vector<1x1x32xf32> to vector<1x32xf32>
    %195 = vector.broadcast %194 : vector<1x32xf32> to vector<8x32xf32>
    %196 = arith.addf %192, %195 : vector<8x32xf32>
    %197 = arith.addf %153, %196 : vector<8x32xf32>
    %c0_85 = arith.constant 0 : index
    %c0_86 = arith.constant 0 : index
    %c0_87 = arith.constant 0 : index
    %198 = vector.load %arg17[%c0_85, %c0_86, %c0_87] : memref<1x8x32xf32, #tpu.memory_space<vmem>>, vector<1x8x32xf32>
    %199 = vector.shape_cast %198 : vector<1x8x32xf32> to vector<8x32xf32>
    %200 = vector.shape_cast %197 : vector<8x32xf32> to vector<1x8x32xf32>
    tpu.vector_store %arg17[%c0_85, %c0_86, %c0_87], %200 {strides = array<i32>} : memref<1x8x32xf32, #tpu.memory_space<vmem>>, vector<1x8x32xf32>,
    return
  }
  func.func @transform_0(%arg0: i32, %arg1: i32) -> (i32, i32, i32) {
    %c0_i32 = arith.constant 0 : i32
    %c0_i32_0 = arith.constant 0 : i32
    %c0_i32_1 = arith.constant 0 : i32
    return %arg0, %c0_i32, %c0_i32_0 : i32, i32, i32
  }
  func.func @transform_1(%arg0: i32, %arg1: i32) -> (i32, i32, i32) {
    %c0_i32 = arith.constant 0 : i32
    %c0_i32_0 = arith.constant 0 : i32
    %c0_i32_1 = arith.constant 0 : i32
    return %arg0, %c0_i32, %c0_i32_0 : i32, i32, i32
  }
  func.func @transform_2(%arg0: i32, %arg1: i32) -> (i32, i32, i32) {
    %c0_i32 = arith.constant 0 : i32
    %c0_i32_0 = arith.constant 0 : i32
    %c0_i32_1 = arith.constant 0 : i32
    return %arg0, %c0_i32, %c0_i32_0 : i32, i32, i32
  }
  func.func @transform_3(%arg0: i32, %arg1: i32) -> (i32, i32) {
    %c0_i32 = arith.constant 0 : i32
    %c0_i32_0 = arith.constant 0 : i32
    %c0_i32_1 = arith.constant 0 : i32
    return %c0_i32, %c0_i32_0 : i32, i32
  }
  func.func @transform_4(%arg0: i32, %arg1: i32) -> (i32, i32) {
    %c0_i32 = arith.constant 0 : i32
    %c0_i32_0 = arith.constant 0 : i32
    %c0_i32_1 = arith.constant 0 : i32
    return %c0_i32, %c0_i32_0 : i32, i32
  }
  func.func @transform_5(%arg0: i32, %arg1: i32) -> (i32, i32) {
    %c0_i32 = arith.constant 0 : i32
    %c0_i32_0 = arith.constant 0 : i32
    %c0_i32_1 = arith.constant 0 : i32
    return %c0_i32, %c0_i32_0 : i32, i32
  }
  func.func @transform_6(%arg0: i32, %arg1: i32) -> (i32, i32) {
    %c0_i32 = arith.constant 0 : i32
    %c0_i32_0 = arith.constant 0 : i32
    %c0_i32_1 = arith.constant 0 : i32
    return %c0_i32, %c0_i32_0 : i32, i32
  }
  func.func @transform_7(%arg0: i32, %arg1: i32) -> (i32, i32, i32) {
    %c0_i32 = arith.constant 0 : i32
    %c0_i32_0 = arith.constant 0 : i32
    %c0_i32_1 = arith.constant 0 : i32
    return %arg1, %c0_i32, %c0_i32_0 : i32, i32, i32
  }
  func.func @transform_8(%arg0: i32, %arg1: i32) -> (i32, i32, i32) {
    %c0_i32 = arith.constant 0 : i32
    %c0_i32_0 = arith.constant 0 : i32
    %c0_i32_1 = arith.constant 0 : i32
    return %arg1, %c0_i32, %c0_i32_0 : i32, i32, i32
  }
  func.func @transform_9(%arg0: i32, %arg1: i32) -> (i32, i32, i32, i32) {
    %c0_i32 = arith.constant 0 : i32
    %c0_i32_0 = arith.constant 0 : i32
    %c0_i32_1 = arith.constant 0 : i32
    %c0_i32_2 = arith.constant 0 : i32
    return %arg1, %c0_i32, %c0_i32_0, %c0_i32_1 : i32, i32, i32, i32
  }
  func.func @transform_10(%arg0: i32, %arg1: i32) -> (i32, i32, i32) {
    %c0_i32 = arith.constant 0 : i32
    %c0_i32_0 = arith.constant 0 : i32
    %c0_i32_1 = arith.constant 0 : i32
    return %arg1, %c0_i32, %c0_i32_0 : i32, i32, i32
  }
  func.func @transform_11(%arg0: i32, %arg1: i32) -> (i32, i32, i32) {
    %c0_i32 = arith.constant 0 : i32
    %c0_i32_0 = arith.constant 0 : i32
    %c0_i32_1 = arith.constant 0 : i32
    return %arg1, %c0_i32, %c0_i32_0 : i32, i32, i32
  }
  func.func @transform_12(%arg0: i32, %arg1: i32) -> (i32, i32, i32) {
    %c0_i32 = arith.constant 0 : i32
    %c0_i32_0 = arith.constant 0 : i32
    %c0_i32_1 = arith.constant 0 : i32
    return %arg1, %c0_i32, %c0_i32_0 : i32, i32, i32
  }
  func.func @transform_13(%arg0: i32, %arg1: i32) -> (i32, i32, i32) {
    %c0_i32 = arith.constant 0 : i32
    %c0_i32_0 = arith.constant 0 : i32
    %c0_i32_1 = arith.constant 0 : i32
    return %arg1, %c0_i32, %c0_i32_0 : i32, i32, i32
  }
  func.func @transform_14(%arg0: i32, %arg1: i32) -> (i32, i32, i32) {
    %c0_i32 = arith.constant 0 : i32
    %c0_i32_0 = arith.constant 0 : i32
    %c0_i32_1 = arith.constant 0 : i32
    return %arg1, %c0_i32, %c0_i32_0 : i32, i32, i32
  }
  func.func @transform_15(%arg0: i32, %arg1: i32) -> (i32, i32, i32) {
    %c0_i32 = arith.constant 0 : i32
    %c0_i32_0 = arith.constant 0 : i32
    %c0_i32_1 = arith.constant 0 : i32
    return %arg0, %c0_i32, %c0_i32_0 : i32, i32, i32
  }
}

</mosaic_0001>

<llo_original>
// kernel: tpu_custom_call.1
$region0: #{tpu_custom_call.1}
  #allocation0 [shape = 'u32[]', space=smem, size = 0x4, offset = 0x4, fixed_abs, tag = 'smem constant byte address 0x4 - core index']
  #allocation1 [shape = 'u32[144,128]{1,0:T(1,128)}', space=vmem, size = 0x12000, scoped, tag = 'internal scratch']
  %s0 = inlined_call_operand.hbm [shape: f32[2,8,32], index: 0, kind: input, shape index: {}]
  %s1 = inlined_call_operand.hbm [shape: f32[2,1,8], index: 1, kind: input, shape index: {}]
  %s2 = inlined_call_operand.hbm [shape: f32[2,8,1], index: 2, kind: input, shape index: {}]
  %s3 = inlined_call_operand.hbm [shape: f32[1,32], index: 3, kind: input, shape index: {}]
  %s4 = inlined_call_operand.hbm [shape: f32[1,32], index: 4, kind: input, shape index: {}]
  %s5 = inlined_call_operand.hbm [shape: f32[1,32], index: 5, kind: input, shape index: {}]
  %s6 = inlined_call_operand.hbm [shape: f32[1,32], index: 6, kind: input, shape index: {}]
  %s7 = inlined_call_operand.hbm [shape: bf16[2,32,96], index: 7, kind: input, shape index: {}]
  %s8 = inlined_call_operand.hbm [shape: f32[2,1,96], index: 8, kind: input, shape index: {}]
  %s9 = inlined_call_operand.hbm [shape: bf16[2,4,8,32], index: 9, kind: input, shape index: {}]
  %s10 = inlined_call_operand.hbm [shape: f32[2,1,32], index: 10, kind: input, shape index: {}]
  %s11 = inlined_call_operand.hbm [shape: bf16[2,32,64], index: 11, kind: input, shape index: {}]
  %s12 = inlined_call_operand.hbm [shape: f32[2,1,64], index: 12, kind: input, shape index: {}]
  %s13 = inlined_call_operand.hbm [shape: bf16[2,64,32], index: 13, kind: input, shape index: {}]
  %s14 = inlined_call_operand.hbm [shape: f32[2,1,32], index: 14, kind: input, shape index: {}]
  %s15 = inlined_call_operand.hbm [shape: f32[2,8,32], index: 15, kind: output, shape index: {}]
  %s16 = sld [smem:[#allocation0]]
  $region157: #{tpu_custom_call.1} parent=0
    _
  %s18 = ssub.s32 1, %s16
  %s19 = scalar_select 0, %s18, %s16
  $region1: #{tpu_custom_call.1} parent=0
    #allocation2 [shape = 'u8[8192]{0}', space=vmem, size = 0x2000, scoped, tag = 'input window, operand 0']
    #allocation3 [shape = 's32[2]{0}', space=sflag, size = 0x8, scoped, tag = 'scoped memory for tpu_custom_call.1']
    #allocation4 [shape = 's32[2]{0}', space=sflag, size = 0x8, scoped, tag = 'scoped memory for tpu_custom_call.1']
    #allocation5 [shape = 'u8[1024]{0}', space=vmem, size = 0x400, scoped, tag = 'input window, operand 1']
    #allocation6 [shape = 's32[2]{0}', space=sflag, size = 0x8, scoped, tag = 'scoped memory for tpu_custom_call.1']
    #allocation7 [shape = 'u8[8192]{0}', space=vmem, size = 0x2000, scoped, tag = 'input window, operand 2']
    #allocation8 [shape = 'u8[512]{0}', space=vmem, size = 0x400, scoped, tag = 'input window, operand 3, single buffered']
    #allocation9 [shape = 's32[1]{0}', space=sflag, size = 0x4, scoped, tag = 'scoped memory for tpu_custom_call.1']
    #allocation10 [shape = 'u8[512]{0}', space=vmem, size = 0x400, scoped, tag = 'input window, operand 4, single buffered']
    #allocation11 [shape = 'u8[512]{0}', space=vmem, size = 0x400, scoped, tag = 'input window, operand 5, single buffered']
    #allocation12 [shape = 's32[1]{0}', space=sflag, size = 0x4, scoped, tag = 'scoped memory for tpu_custom_call.1']
    #allocation13 [shape = 'u8[512]{0}', space=vmem, size = 0x400, scoped, tag = 'input window, operand 6, single buffered']
    #allocation14 [shape = 'u8[16384]{0}', space=vmem, size = 0x4000, scoped, tag = 'input window, operand 7']
    #allocation15 [shape = 's32[2]{0}', space=sflag, size = 0x8, scoped, tag = 'scoped memory for tpu_custom_call.1']
    #allocation16 [shape = 'u8[1024]{0}', space=vmem, size = 0x400, scoped, tag = 'input window, operand 8']
    #allocation17 [shape = 'u8[16384]{0}', space=vmem, size = 0x4000, scoped, tag = 'input window, operand 9']
    #allocation18 [shape = 's32[2]{0}', space=sflag, size = 0x8, scoped, tag = 'scoped memory for tpu_custom_call.1']
    #allocation19 [shape = 'u8[1024]{0}', space=vmem, size = 0x400, scoped, tag = 'input window, operand 10']
    #allocation20 [shape = 'u8[16384]{0}', space=vmem, size = 0x4000, scoped, tag = 'input window, operand 11']
    #allocation21 [shape = 's32[2]{0}', space=sflag, size = 0x8, scoped, tag = 'scoped memory for tpu_custom_call.1']
    #allocation22 [shape = 'u8[1024]{0}', space=vmem, size = 0x400, scoped, tag = 'input window, operand 12']
    #allocation23 [shape = 'u8[32768]{0}', space=vmem, size = 0x8000, scoped, tag = 'input window, operand 13']
    #allocation24 [shape = 's32[2]{0}', space=sflag, size = 0x8, scoped, tag = 'scoped memory for tpu_custom_call.1']
    #allocation25 [shape = 'u8[1024]{0}', space=vmem, size = 0x400, scoped, tag = 'input window, operand 14']
    #allocation26 [shape = 'u8[8192]{0}', space=vmem, size = 0x2000, scoped, tag = 'output window, operand 0']
    %20 = vsyncpa [#allocation3], 0
    %s21 = scalar_lea.sflag [#allocation3], 1
    %22 = vsyncpa %s21, 0
    %23 = vsyncpa [#allocation6], 0
    %s24 = scalar_lea.sflag [#allocation6], 1
    %25 = vsyncpa %s24, 0
    %26 = vsyncpa [#allocation9], 0
    %27 = vsyncpa [#allocation12], 0
    %28 = vsyncpa [#allocation15], 0
    %s29 = scalar_lea.sflag [#allocation15], 1
    %30 = vsyncpa %s29, 0
    %31 = vsyncpa [#allocation18], 0
    %s32 = scalar_lea.sflag [#allocation18], 1
    %33 = vsyncpa %s32, 0
    %34 = vsyncpa [#allocation21], 0
    %s35 = scalar_lea.sflag [#allocation21], 1
    %36 = vsyncpa %s35, 0
    %37 = vsyncpa [#allocation24], 0
    %s38 = scalar_lea.sflag [#allocation24], 1
    %39 = vsyncpa %s38, 0
    %40 = vsyncpa [#allocation4], 0
    %s41 = scalar_lea.sflag [#allocation4], 1
    %42 = vsyncpa %s41, 0
    loop: start=0, step=1, limit=6
    $region2: #{tpu_custom_call.1} parent=1 // loop_pre_header
      _
    $region3: #{tpu_custom_call.1} parent=1 // loop_header
      %s44 = sphi 0, %s48
      %p45 = scmp.ge.s32.totalorder %s44, 6
      %s51 = sphi 0, %s63
      %s52 = sphi 0, %s59
      %s53 = sphi 0, %s51
      %s54 = sphi 0, %s52
      %s55 = sphi 0, %s53
      %s56 = sphi 0, %s54
      %s66 = sphi 0, %s68
      %s69 = sphi 0, %s66
      %s70 = sphi 0, %s69
      %s86 = sphi 0, %s70
      %s92 = sphi 0, %s94
      %s95 = sphi 0, %s92
      %s96 = sphi 0, %s95
      %s112 = sphi 0, %s96
      %s118 = sphi 0, %s120
      %s121 = sphi 0, %s118
      %s122 = sphi 0, %s121
      %s138 = sphi 0, %s122
      %s142 = sphi 0, %s142
      %s144 = sphi 0, %s142
      %s145 = sphi 0, %s144
      %s159 = sphi 0, %s145
      %s163 = sphi 0, %s163
      %s165 = sphi 0, %s163
      %s166 = sphi 0, %s165
      %s180 = sphi 0, %s166
      %s184 = sphi 0, %s184
      %s186 = sphi 0, %s184
      %s187 = sphi 0, %s186
      %s201 = sphi 0, %s187
      %s205 = sphi 0, %s205
      %s207 = sphi 0, %s205
      %s208 = sphi 0, %s207
      %s222 = sphi 0, %s208
      %s228 = sphi 0, %s230
      %s231 = sphi 0, %s228
      %s232 = sphi 0, %s231
      %s248 = sphi 0, %s232
      %s254 = sphi 0, %s256
      %s257 = sphi 0, %s254
      %s258 = sphi 0, %s257
      %s274 = sphi 0, %s258
      %s280 = sphi 0, %s282
      %s283 = sphi 0, %s280
      %s284 = sphi 0, %s283
      %s300 = sphi 0, %s284
      %s306 = sphi 0, %s308
      %s309 = sphi 0, %s306
      %s310 = sphi 0, %s309
      %s326 = sphi 0, %s310
      %s332 = sphi 0, %s334
      %s335 = sphi 0, %s332
      %s336 = sphi 0, %s335
      %s352 = sphi 0, %s336
      %s358 = sphi 0, %s360
      %s361 = sphi 0, %s358
      %s362 = sphi 0, %s361
      %s378 = sphi 0, %s362
      %s384 = sphi 0, %s386
      %s387 = sphi 0, %s384
      %s388 = sphi 0, %s387
      %s404 = sphi 0, %s388
      %s410 = sphi 0, %s412
      %s413 = sphi 0, %s410
      %s414 = sphi 0, %s413
      %s430 = sphi 0, %s414
      %s436 = sphi 0, %s438
      %s439 = sphi 0, %s436
      %s440 = sphi 0, %s439
      %s456 = sphi 0, %s440
    $region4: #{tpu_custom_call.1} parent=1 // loop_header_branch
      %47 = sbr.rel (%p45) target = $region8
    $region5: #{tpu_custom_call.1} parent=1 // loop_body
      %s49 = ssub.s32 %s44, 1
      %s50 = ssub.s32 %s44, 2
      %s57 = sadd.s32 1, %s52
      %p58 = scmp.ge.s32.totalorder %s57, 2
      %s59 = scalar_select %p58, 0, %s57
      %s60 = sadd.s32 1, %s51
      %s61 = scalar_select %p58, %s60, %s51
      %p62 = scmp.ge.s32.totalorder %s61, 2
      %s63 = scalar_select %p62, 0, %s61
      %s64 = ssub.s32 %s51, %s63
      %p65 = scmp.eq.s32.totalorder %s64, 0
      %s67 = sadd.s32 %s66, 1
      %s68 = scalar_select %p65, %s66, %s67
      %p71 = pneg %p65
      %p72 = scmp.eq.s32.totalorder %s44, 3
      %p73 = por %p71, %p72
      %p74 = scmp.ne.s32.totalorder %s66, %s69
      %p75 = scmp.eq.s32.totalorder %s44, 0
      %p76 = por %p74, %p75
      %p77 = scmp.ne.s32.totalorder %s66, %s69
      %p78 = scmp.eq.s32.totalorder %s49, 3
      %p79 = por %p77, %p78
      %p80 = scmp.ne.s32.totalorder %s69, %s70
      %p81 = scmp.eq.s32.totalorder %s49, 0
      %p82 = por %p80, %p81
      %p83 = scmp.ne.s32.totalorder %s69, %s70
      %p84 = scmp.eq.s32.totalorder %s50, 3
      %p85 = por %p83, %p84
      %p87 = scmp.ne.s32.totalorder %s70, %s86
      %p88 = scmp.eq.s32.totalorder %s50, 0
      %p89 = por %p87, %p88
      %s90 = ssub.s32 %s51, %s63
      %p91 = scmp.eq.s32.totalorder %s90, 0
      %s93 = sadd.s32 %s92, 1
      %s94 = scalar_select %p91, %s92, %s93
      %p97 = pneg %p91
      %p98 = scmp.eq.s32.totalorder %s44, 3
      %p99 = por %p97, %p98
      %p100 = scmp.ne.s32.totalorder %s92, %s95
      %p101 = scmp.eq.s32.totalorder %s44, 0
      %p102 = por %p100, %p101
      %p103 = scmp.ne.s32.totalorder %s92, %s95
      %p104 = scmp.eq.s32.totalorder %s49, 3
      %p105 = por %p103, %p104
      %p106 = scmp.ne.s32.totalorder %s95, %s96
      %p107 = scmp.eq.s32.totalorder %s49, 0
      %p108 = por %p106, %p107
      %p109 = scmp.ne.s32.totalorder %s95, %s96
      %p110 = scmp.eq.s32.totalorder %s50, 3
      %p111 = por %p109, %p110
      %p113 = scmp.ne.s32.totalorder %s96, %s112
      %p114 = scmp.eq.s32.totalorder %s50, 0
      %p115 = por %p113, %p114
      %s116 = ssub.s32 %s51, %s63
      %p117 = scmp.eq.s32.totalorder %s116, 0
      %s119 = sadd.s32 %s118, 1
      %s120 = scalar_select %p117, %s118, %s119
      %p123 = pneg %p117
      %p124 = scmp.eq.s32.totalorder %s44, 3
      %p125 = por %p123, %p124
      %p126 = scmp.ne.s32.totalorder %s118, %s121
      %p127 = scmp.eq.s32.totalorder %s44, 0
      %p128 = por %p126, %p127
      %p129 = scmp.ne.s32.totalorder %s118, %s121
      %p130 = scmp.eq.s32.totalorder %s49, 3
      %p131 = por %p129, %p130
      %p132 = scmp.ne.s32.totalorder %s121, %s122
      %p133 = scmp.eq.s32.totalorder %s49, 0
      %p134 = por %p132, %p133
      %p135 = scmp.ne.s32.totalorder %s121, %s122
      %p136 = scmp.eq.s32.totalorder %s50, 3
      %p137 = por %p135, %p136
      %p139 = scmp.ne.s32.totalorder %s122, %s138
      %p140 = scmp.eq.s32.totalorder %s50, 0
      %p141 = por %p139, %p140
      %s143 = sadd.s32 %s142, 1
      %p146 = scmp.eq.s32.totalorder %s44, 3
      %p147 = scmp.ne.s32.totalorder %s142, %s144
      %p148 = scmp.eq.s32.totalorder %s44, 0
      %p149 = por %p147, %p148
      %p150 = scmp.ne.s32.totalorder %s142, %s144
      %p151 = scmp.eq.s32.totalorder %s49, 3
      %p152 = por %p150, %p151
      %p153 = scmp.ne.s32.totalorder %s144, %s145
      %p154 = scmp.eq.s32.totalorder %s49, 0
      %p155 = por %p153, %p154
      %p156 = scmp.ne.s32.totalorder %s144, %s145
      %p157 = scmp.eq.s32.totalorder %s50, 3
      %p158 = por %p156, %p157
      %p160 = scmp.ne.s32.totalorder %s145, %s159
      %p161 = scmp.eq.s32.totalorder %s50, 0
      %p162 = por %p160, %p161
      %s164 = sadd.s32 %s163, 1
      %p167 = scmp.eq.s32.totalorder %s44, 3
      %p168 = scmp.ne.s32.totalorder %s163, %s165
      %p169 = scmp.eq.s32.totalorder %s44, 0
      %p170 = por %p168, %p169
      %p171 = scmp.ne.s32.totalorder %s163, %s165
      %p172 = scmp.eq.s32.totalorder %s49, 3
      %p173 = por %p171, %p172
      %p174 = scmp.ne.s32.totalorder %s165, %s166
      %p175 = scmp.eq.s32.totalorder %s49, 0
      %p176 = por %p174, %p175
      %p177 = scmp.ne.s32.totalorder %s165, %s166
      %p178 = scmp.eq.s32.totalorder %s50, 3
      %p179 = por %p177, %p178
      %p181 = scmp.ne.s32.totalorder %s166, %s180
      %p182 = scmp.eq.s32.totalorder %s50, 0
      %p183 = por %p181, %p182
      %s185 = sadd.s32 %s184, 1
      %p188 = scmp.eq.s32.totalorder %s44, 3
      %p189 = scmp.ne.s32.totalorder %s184, %s186
      %p190 = scmp.eq.s32.totalorder %s44, 0
      %p191 = por %p189, %p190
      %p192 = scmp.ne.s32.totalorder %s184, %s186
      %p193 = scmp.eq.s32.totalorder %s49, 3
      %p194 = por %p192, %p193
      %p195 = scmp.ne.s32.totalorder %s186, %s187
      %p196 = scmp.eq.s32.totalorder %s49, 0
      %p197 = por %p195, %p196
      %p198 = scmp.ne.s32.totalorder %s186, %s187
      %p199 = scmp.eq.s32.totalorder %s50, 3
      %p200 = por %p198, %p199
      %p202 = scmp.ne.s32.totalorder %s187, %s201
      %p203 = scmp.eq.s32.totalorder %s50, 0
      %p204 = por %p202, %p203
      %s206 = sadd.s32 %s205, 1
      %p209 = scmp.eq.s32.totalorder %s44, 3
      %p210 = scmp.ne.s32.totalorder %s205, %s207
      %p211 = scmp.eq.s32.totalorder %s44, 0
      %p212 = por %p210, %p211
      %p213 = scmp.ne.s32.totalorder %s205, %s207
      %p214 = scmp.eq.s32.totalorder %s49, 3
      %p215 = por %p213, %p214
      %p216 = scmp.ne.s32.totalorder %s207, %s208
      %p217 = scmp.eq.s32.totalorder %s49, 0
      %p218 = por %p216, %p217
      %p219 = scmp.ne.s32.totalorder %s207, %s208
      %p220 = scmp.eq.s32.totalorder %s50, 3
      %p221 = por %p219, %p220
      %p223 = scmp.ne.s32.totalorder %s208, %s222
      %p224 = scmp.eq.s32.totalorder %s50, 0
      %p225 = por %p223, %p224
      %s226 = ssub.s32 %s52, %s59
      %p227 = scmp.eq.s32.totalorder %s226, 0
      %s229 = sadd.s32 %s228, 1
      %s230 = scalar_select %p227, %s228, %s229
      %p233 = pneg %p227
      %p234 = scmp.eq.s32.totalorder %s44, 3
      %p235 = por %p233, %p234
      %p236 = scmp.ne.s32.totalorder %s228, %s231
      %p237 = scmp.eq.s32.totalorder %s44, 0
      %p238 = por %p236, %p237
      %p239 = scmp.ne.s32.totalorder %s228, %s231
      %p240 = scmp.eq.s32.totalorder %s49, 3
      %p241 = por %p239, %p240
      %p242 = scmp.ne.s32.totalorder %s231, %s232
      %p243 = scmp.eq.s32.totalorder %s49, 0
      %p244 = por %p242, %p243
      %p245 = scmp.ne.s32.totalorder %s231, %s232
      %p246 = scmp.eq.s32.totalorder %s50, 3
      %p247 = por %p245, %p246
      %p249 = scmp.ne.s32.totalorder %s232, %s248
      %p250 = scmp.eq.s32.totalorder %s50, 0
      %p251 = por %p249, %p250
      %s252 = ssub.s32 %s52, %s59
      %p253 = scmp.eq.s32.totalorder %s252, 0
      %s255 = sadd.s32 %s254, 1
      %s256 = scalar_select %p253, %s254, %s255
      %p259 = pneg %p253
      %p260 = scmp.eq.s32.totalorder %s44, 3
      %p261 = por %p259, %p260
      %p262 = scmp.ne.s32.totalorder %s254, %s257
      %p263 = scmp.eq.s32.totalorder %s44, 0
      %p264 = por %p262, %p263
      %p265 = scmp.ne.s32.totalorder %s254, %s257
      %p266 = scmp.eq.s32.totalorder %s49, 3
      %p267 = por %p265, %p266
      %p268 = scmp.ne.s32.totalorder %s257, %s258
      %p269 = scmp.eq.s32.totalorder %s49, 0
      %p270 = por %p268, %p269
      %p271 = scmp.ne.s32.totalorder %s257, %s258
      %p272 = scmp.eq.s32.totalorder %s50, 3
      %p273 = por %p271, %p272
      %p275 = scmp.ne.s32.totalorder %s258, %s274
      %p276 = scmp.eq.s32.totalorder %s50, 0
      %p277 = por %p275, %p276
      %s278 = ssub.s32 %s52, %s59
      %p279 = scmp.eq.s32.totalorder %s278, 0
      %s281 = sadd.s32 %s280, 1
      %s282 = scalar_select %p279, %s280, %s281
      %p285 = pneg %p279
      %p286 = scmp.eq.s32.totalorder %s44, 3
      %p287 = por %p285, %p286
      %p288 = scmp.ne.s32.totalorder %s280, %s283
      %p289 = scmp.eq.s32.totalorder %s44, 0
      %p290 = por %p288, %p289
      %p291 = scmp.ne.s32.totalorder %s280, %s283
      %p292 = scmp.eq.s32.totalorder %s49, 3
      %p293 = por %p291, %p292
      %p294 = scmp.ne.s32.totalorder %s283, %s284
      %p295 = scmp.eq.s32.totalorder %s49, 0
      %p296 = por %p294, %p295
      %p297 = scmp.ne.s32.totalorder %s283, %s284
      %p298 = scmp.eq.s32.totalorder %s50, 3
      %p299 = por %p297, %p298
      %p301 = scmp.ne.s32.totalorder %s284, %s300
      %p302 = scmp.eq.s32.totalorder %s50, 0
      %p303 = por %p301, %p302
      %s304 = ssub.s32 %s52, %s59
      %p305 = scmp.eq.s32.totalorder %s304, 0
      %s307 = sadd.s32 %s306, 1
      %s308 = scalar_select %p305, %s306, %s307
      %p311 = pneg %p305
      %p312 = scmp.eq.s32.totalorder %s44, 3
      %p313 = por %p311, %p312
      %p314 = scmp.ne.s32.totalorder %s306, %s309
      %p315 = scmp.eq.s32.totalorder %s44, 0
      %p316 = por %p314, %p315
      %p317 = scmp.ne.s32.totalorder %s306, %s309
      %p318 = scmp.eq.s32.totalorder %s49, 3
      %p319 = por %p317, %p318
      %p320 = scmp.ne.s32.totalorder %s309, %s310
      %p321 = scmp.eq.s32.totalorder %s49, 0
      %p322 = por %p320, %p321
      %p323 = scmp.ne.s32.totalorder %s309, %s310
      %p324 = scmp.eq.s32.totalorder %s50, 3
      %p325 = por %p323, %p324
      %p327 = scmp.ne.s32.totalorder %s310, %s326
      %p328 = scmp.eq.s32.totalorder %s50, 0
      %p329 = por %p327, %p328
      %s330 = ssub.s32 %s52, %s59
      %p331 = scmp.eq.s32.totalorder %s330, 0
      %s333 = sadd.s32 %s332, 1
      %s334 = scalar_select %p331, %s332, %s333
      %p337 = pneg %p331
      %p338 = scmp.eq.s32.totalorder %s44, 3
      %p339 = por %p337, %p338
      %p340 = scmp.ne.s32.totalorder %s332, %s335
      %p341 = scmp.eq.s32.totalorder %s44, 0
      %p342 = por %p340, %p341
      %p343 = scmp.ne.s32.totalorder %s332, %s335
      %p344 = scmp.eq.s32.totalorder %s49, 3
      %p345 = por %p343, %p344
      %p346 = scmp.ne.s32.totalorder %s335, %s336
      %p347 = scmp.eq.s32.totalorder %s49, 0
      %p348 = por %p346, %p347
      %p349 = scmp.ne.s32.totalorder %s335, %s336
      %p350 = scmp.eq.s32.totalorder %s50, 3
      %p351 = por %p349, %p350
      %p353 = scmp.ne.s32.totalorder %s336, %s352
      %p354 = scmp.eq.s32.totalorder %s50, 0
      %p355 = por %p353, %p354
      %s356 = ssub.s32 %s52, %s59
      %p357 = scmp.eq.s32.totalorder %s356, 0
      %s359 = sadd.s32 %s358, 1
      %s360 = scalar_select %p357, %s358, %s359
      %p363 = pneg %p357
      %p364 = scmp.eq.s32.totalorder %s44, 3
      %p365 = por %p363, %p364
      %p366 = scmp.ne.s32.totalorder %s358, %s361
      %p367 = scmp.eq.s32.totalorder %s44, 0
      %p368 = por %p366, %p367
      %p369 = scmp.ne.s32.totalorder %s358, %s361
      %p370 = scmp.eq.s32.totalorder %s49, 3
      %p371 = por %p369, %p370
      %p372 = scmp.ne.s32.totalorder %s361, %s362
      %p373 = scmp.eq.s32.totalorder %s49, 0
      %p374 = por %p372, %p373
      %p375 = scmp.ne.s32.totalorder %s361, %s362
      %p376 = scmp.eq.s32.totalorder %s50, 3
      %p377 = por %p375, %p376
      %p379 = scmp.ne.s32.totalorder %s362, %s378
      %p380 = scmp.eq.s32.totalorder %s50, 0
      %p381 = por %p379, %p380
      %s382 = ssub.s32 %s52, %s59
      %p383 = scmp.eq.s32.totalorder %s382, 0
      %s385 = sadd.s32 %s384, 1
      %s386 = scalar_select %p383, %s384, %s385
      %p389 = pneg %p383
      %p390 = scmp.eq.s32.totalorder %s44, 3
      %p391 = por %p389, %p390
      %p392 = scmp.ne.s32.totalorder %s384, %s387
      %p393 = scmp.eq.s32.totalorder %s44, 0
      %p394 = por %p392, %p393
      %p395 = scmp.ne.s32.totalorder %s384, %s387
      %p396 = scmp.eq.s32.totalorder %s49, 3
      %p397 = por %p395, %p396
      %p398 = scmp.ne.s32.totalorder %s387, %s388
      %p399 = scmp.eq.s32.totalorder %s49, 0
      %p400 = por %p398, %p399
      %p401 = scmp.ne.s32.totalorder %s387, %s388
      %p402 = scmp.eq.s32.totalorder %s50, 3
      %p403 = por %p401, %p402
      %p405 = scmp.ne.s32.totalorder %s388, %s404
      %p406 = scmp.eq.s32.totalorder %s50, 0
      %p407 = por %p405, %p406
      %s408 = ssub.s32 %s52, %s59
      %p409 = scmp.eq.s32.totalorder %s408, 0
      %s411 = sadd.s32 %s410, 1
      %s412 = scalar_select %p409, %s410, %s411
      %p415 = pneg %p409
      %p416 = scmp.eq.s32.totalorder %s44, 3
      %p417 = por %p415, %p416
      %p418 = scmp.ne.s32.totalorder %s410, %s413
      %p419 = scmp.eq.s32.totalorder %s44, 0
      %p420 = por %p418, %p419
      %p421 = scmp.ne.s32.totalorder %s410, %s413
      %p422 = scmp.eq.s32.totalorder %s49, 3
      %p423 = por %p421, %p422
      %p424 = scmp.ne.s32.totalorder %s413, %s414
      %p425 = scmp.eq.s32.totalorder %s49, 0
      %p426 = por %p424, %p425
      %p427 = scmp.ne.s32.totalorder %s413, %s414
      %p428 = scmp.eq.s32.totalorder %s50, 3
      %p429 = por %p427, %p428
      %p431 = scmp.ne.s32.totalorder %s414, %s430
      %p432 = scmp.eq.s32.totalorder %s50, 0
      %p433 = por %p431, %p432
      %s434 = ssub.s32 %s51, %s63
      %p435 = scmp.eq.s32.totalorder %s434, 0
      %s437 = sadd.s32 %s436, 1
      %s438 = scalar_select %p435, %s436, %s437
      %p441 = pneg %p435
      %p442 = scmp.eq.s32.totalorder %s44, 3
      %p443 = por %p441, %p442
      %p444 = scmp.ne.s32.totalorder %s436, %s439
      %p445 = scmp.eq.s32.totalorder %s44, 0
      %p446 = por %p444, %p445
      %p447 = scmp.ne.s32.totalorder %s436, %s439
      %p448 = scmp.eq.s32.totalorder %s49, 3
      %p449 = por %p447, %p448
      %p450 = scmp.ne.s32.totalorder %s439, %s440
      %p451 = scmp.eq.s32.totalorder %s49, 0
      %p452 = por %p450, %p451
      %p453 = scmp.ne.s32.totalorder %s439, %s440
      %p454 = scmp.eq.s32.totalorder %s50, 3
      %p455 = por %p453, %p454
      %p457 = scmp.ne.s32.totalorder %s440, %s456
      %p458 = scmp.eq.s32.totalorder %s50, 0
      %p459 = por %p457, %p458
      %p460 = scmp.le.s32.totalorder 1, %s44
      %p461 = scmp.lt.s32.totalorder %s44, 5
      %p462 = pnand %p460, %p461
      %p463 = pneg %p462
      // Predicated region
      $region9: #{tpu_custom_call.1} parent=5 // pred_check
        _
      $region10: #{tpu_custom_call.1} parent=5 // pred_check_branch
        %465 = sbr.rel (%p462) target = $region12
      $region11: #{tpu_custom_call.1} parent=5 // pred_region
        %s466 = ssub.s32 %s44, 1
        // Predicated region
        $region13: #{tpu_custom_call.1} parent=11 // pred_check
          %p467 = pneg %p155
        $region14: #{tpu_custom_call.1} parent=11 // pred_check_branch
          %469 = sbr.rel (%p467) target = $region16
        $region15: #{tpu_custom_call.1} parent=11 // pred_region
          %s471 = ssub.s32 16, 16
          %472 = vsyncadd [#allocation9], %s471
          %s474 = sshll.u32 [#allocation8], 4
          %s475 = int_to_ptr.vmem [resolvable:$true] %s474
          %477 = dma.hbm_to_vmem [thread:$0]  %s3, 16, %s475, [#allocation9]
        $region16: #{tpu_custom_call.1} parent=11 // pred_fallthru
          _
        // Predicated region
        $region17: #{tpu_custom_call.1} parent=11 // pred_check
          %p478 = pneg %p176
        $region18: #{tpu_custom_call.1} parent=11 // pred_check_branch
          %480 = sbr.rel (%p478) target = $region20
        $region19: #{tpu_custom_call.1} parent=11 // pred_region
          %s482 = ssub.s32 16, 16
          %483 = vsyncadd [#allocation9], %s482
          %s485 = sshll.u32 [#allocation10], 4
          %s486 = int_to_ptr.vmem [resolvable:$true] %s485
          %488 = dma.hbm_to_vmem [thread:$0]  %s4, 16, %s486, [#allocation9]
        $region20: #{tpu_custom_call.1} parent=11 // pred_fallthru
          _
        // Predicated region
        $region21: #{tpu_custom_call.1} parent=11 // pred_check
          %p489 = pneg %p197
        $region22: #{tpu_custom_call.1} parent=11 // pred_check_branch
          %491 = sbr.rel (%p489) target = $region24
        $region23: #{tpu_custom_call.1} parent=11 // pred_region
          %s493 = ssub.s32 16, 16
          %494 = vsyncadd [#allocation12], %s493
          %s496 = sshll.u32 [#allocation11], 4
          %s497 = int_to_ptr.vmem [resolvable:$true] %s496
          %499 = dma.hbm_to_vmem [thread:$0]  %s5, 16, %s497, [#allocation12]
        $region24: #{tpu_custom_call.1} parent=11 // pred_fallthru
          _
        // Predicated region
        $region25: #{tpu_custom_call.1} parent=11 // pred_check
          %p500 = pneg %p218
        $region26: #{tpu_custom_call.1} parent=11 // pred_check_branch
          %502 = sbr.rel (%p500) target = $region28
        $region27: #{tpu_custom_call.1} parent=11 // pred_region
          %s504 = ssub.s32 16, 16
          %505 = vsyncadd [#allocation12], %s504
          %s507 = sshll.u32 [#allocation13], 4
          %s508 = int_to_ptr.vmem [resolvable:$true] %s507
          %510 = dma.hbm_to_vmem [thread:$0]  %s6, 16, %s508, [#allocation12]
        $region28: #{tpu_custom_call.1} parent=11 // pred_fallthru
          _
      $region12: #{tpu_custom_call.1} parent=5 // pred_fallthru
        _
      %p511 = scmp.lt.s32.totalorder %s44, 4
      // Predicated region
      $region29: #{tpu_custom_call.1} parent=5 // pred_check
        %p512 = pneg %p511
      $region30: #{tpu_custom_call.1} parent=5 // pred_check_branch
        %514 = sbr.rel (%p512) target = $region32
      $region31: #{tpu_custom_call.1} parent=5 // pred_region
        // Predicated region
        $region33: #{tpu_custom_call.1} parent=31 // pred_check
          %p515 = pneg %p76
        $region34: #{tpu_custom_call.1} parent=31 // pred_check_branch
          %517 = sbr.rel (%p515) target = $region36
        $region35: #{tpu_custom_call.1} parent=31 // pred_region
          %s518 = sand.u32 %s66, 1
          %s519 = scalar_lea.sflag [#allocation3], %s518
          %s520 = sand.u32 %s66, 1
          %s521 = smul.addr %s520, 8
          %s522 = scalar_lea.vmem [#allocation2], %s521
          %s524 = ssub.s32 128, 128
          %525 = vsyncadd %s519, %s524
          %s526 = smul.addr %s51, 128
          %s527 = scalar_lea.hbm %s0, %s526
          %s529 = sshll.u32 %s522, 4
          %s530 = int_to_ptr.vmem [resolvable:$true] %s529
          %532 = dma.hbm_to_vmem [thread:$0]  %s527, 128, %s530, %s519
        $region36: #{tpu_custom_call.1} parent=31 // pred_fallthru
          _
        // Predicated region
        $region37: #{tpu_custom_call.1} parent=31 // pred_check
          %p533 = pneg %p102
        $region38: #{tpu_custom_call.1} parent=31 // pred_check_branch
          %535 = sbr.rel (%p533) target = $region40
        $region39: #{tpu_custom_call.1} parent=31 // pred_region
          %s536 = sand.u32 %s44, 1
          %s537 = scalar_lea.sflag [#allocation6], %s536
          %s538 = sand.u32 %s92, 1
          %s539 = scalar_lea.vmem [#allocation5], %s538
          %s541 = ssub.s32 16, 16
          %542 = vsyncadd %s537, %s541
          %s543 = smul.addr %s51, 16
          %s544 = scalar_lea.hbm %s1, %s543
          %s546 = sshll.u32 %s539, 4
          %s547 = int_to_ptr.vmem [resolvable:$true] %s546
          %549 = dma.hbm_to_vmem [thread:$0]  %s544, 16, %s547, %s537
        $region40: #{tpu_custom_call.1} parent=31 // pred_fallthru
          _
        // Predicated region
        $region41: #{tpu_custom_call.1} parent=31 // pred_check
          %p550 = pneg %p128
        $region42: #{tpu_custom_call.1} parent=31 // pred_check_branch
          %552 = sbr.rel (%p550) target = $region44
        $region43: #{tpu_custom_call.1} parent=31 // pred_region
          %s553 = sand.u32 %s44, 1
          %s554 = scalar_lea.sflag [#allocation6], %s553
          %s555 = sand.u32 %s118, 1
          %s556 = smul.addr %s555, 8
          %s557 = scalar_lea.vmem [#allocation7], %s556
          %s559 = ssub.s32 128, 128
          %560 = vsyncadd %s554, %s559
          %s561 = smul.addr %s51, 128
          %s562 = scalar_lea.hbm %s2, %s561
          %s564 = sshll.u32 %s557, 4
          %s565 = int_to_ptr.vmem [resolvable:$true] %s564
          %567 = dma.hbm_to_vmem [thread:$0]  %s562, 128, %s565, %s554
        $region44: #{tpu_custom_call.1} parent=31 // pred_fallthru
          _
        // Predicated region
        $region45: #{tpu_custom_call.1} parent=31 // pred_check
          %p568 = pneg %p238
        $region46: #{tpu_custom_call.1} parent=31 // pred_check_branch
          %570 = sbr.rel (%p568) target = $region48
        $region47: #{tpu_custom_call.1} parent=31 // pred_region
          %s571 = sand.u32 %s44, 1
          %s572 = scalar_lea.sflag [#allocation15], %s571
          %s573 = sand.u32 %s228, 1
          %s574 = smul.addr %s573, 16
          %s575 = scalar_lea.vmem [#allocation14], %s574
          %s577 = ssub.s32 256, 256
          %578 = vsyncadd %s572, %s577
          %s579 = smul.addr %s52, 4
          %s580 = smul.addr %s579, 64
          %s581 = scalar_lea.hbm %s7, %s580
          %s582 = sshll.u32 %s575, 4
          %s583 = int_to_ptr.vmem [resolvable:$true] %s582
          %588 = dma.hbm_to_vmem [thread:$0]  %s581, 256, %s583, %s572, 64, 64, 4
        $region48: #{tpu_custom_call.1} parent=31 // pred_fallthru
          _
        // Predicated region
        $region49: #{tpu_custom_call.1} parent=31 // pred_check
          %p589 = pneg %p264
        $region50: #{tpu_custom_call.1} parent=31 // pred_check_branch
          %591 = sbr.rel (%p589) target = $region52
        $region51: #{tpu_custom_call.1} parent=31 // pred_region
          %s592 = sand.u32 %s44, 1
          %s593 = scalar_lea.sflag [#allocation15], %s592
          %s594 = sand.u32 %s254, 1
          %s595 = scalar_lea.vmem [#allocation16], %s594
          %s597 = ssub.s32 16, 16
          %598 = vsyncadd %s593, %s597
          %s599 = smul.addr %s52, 16
          %s600 = scalar_lea.hbm %s8, %s599
          %s602 = sshll.u32 %s595, 4
          %s603 = int_to_ptr.vmem [resolvable:$true] %s602
          %605 = dma.hbm_to_vmem [thread:$0]  %s600, 16, %s603, %s593
        $region52: #{tpu_custom_call.1} parent=31 // pred_fallthru
          _
        // Predicated region
        $region53: #{tpu_custom_call.1} parent=31 // pred_check
          %p606 = pneg %p290
        $region54: #{tpu_custom_call.1} parent=31 // pred_check_branch
          %608 = sbr.rel (%p606) target = $region56
        $region55: #{tpu_custom_call.1} parent=31 // pred_region
          %s609 = sand.u32 %s44, 1
          %s610 = scalar_lea.sflag [#allocation18], %s609
          %s611 = sand.u32 %s280, 1
          %s612 = smul.addr %s611, 16
          %s613 = scalar_lea.vmem [#allocation17], %s612
          %s615 = ssub.s32 256, 256
          %616 = vsyncadd %s610, %s615
          %s617 = smul.addr %s52, 4
          %s618 = smul.addr %s617, 64
          %s619 = scalar_lea.hbm %s9, %s618
          %s620 = sshll.u32 %s613, 4
          %s621 = int_to_ptr.vmem [resolvable:$true] %s620
          %626 = dma.hbm_to_vmem [thread:$0]  %s619, 256, %s621, %s610, 64, 64, 4
        $region56: #{tpu_custom_call.1} parent=31 // pred_fallthru
          _
        // Predicated region
        $region57: #{tpu_custom_call.1} parent=31 // pred_check
          %p627 = pneg %p316
        $region58: #{tpu_custom_call.1} parent=31 // pred_check_branch
          %629 = sbr.rel (%p627) target = $region60
        $region59: #{tpu_custom_call.1} parent=31 // pred_region
          %s630 = sand.u32 %s44, 1
          %s631 = scalar_lea.sflag [#allocation18], %s630
          %s632 = sand.u32 %s306, 1
          %s633 = scalar_lea.vmem [#allocation19], %s632
          %s635 = ssub.s32 16, 16
          %636 = vsyncadd %s631, %s635
          %s637 = smul.addr %s52, 16
          %s638 = scalar_lea.hbm %s10, %s637
          %s640 = sshll.u32 %s633, 4
          %s641 = int_to_ptr.vmem [resolvable:$true] %s640
          %643 = dma.hbm_to_vmem [thread:$0]  %s638, 16, %s641, %s631
        $region60: #{tpu_custom_call.1} parent=31 // pred_fallthru
          _
        // Predicated region
        $region61: #{tpu_custom_call.1} parent=31 // pred_check
          %p644 = pneg %p342
        $region62: #{tpu_custom_call.1} parent=31 // pred_check_branch
          %646 = sbr.rel (%p644) target = $region64
        $region63: #{tpu_custom_call.1} parent=31 // pred_region
          %s647 = sand.u32 %s44, 1
          %s648 = scalar_lea.sflag [#allocation21], %s647
          %s649 = sand.u32 %s332, 1
          %s650 = smul.addr %s649, 16
          %s651 = scalar_lea.vmem [#allocation20], %s650
          %s653 = ssub.s32 256, 256
          %654 = vsyncadd %s648, %s653
          %s655 = smul.addr %s52, 4
          %s656 = smul.addr %s655, 64
          %s657 = scalar_lea.hbm %s11, %s656
          %s658 = sshll.u32 %s651, 4
          %s659 = int_to_ptr.vmem [resolvable:$true] %s658
          %664 = dma.hbm_to_vmem [thread:$0]  %s657, 256, %s659, %s648, 64, 64, 4
        $region64: #{tpu_custom_call.1} parent=31 // pred_fallthru
          _
        // Predicated region
        $region65: #{tpu_custom_call.1} parent=31 // pred_check
          %p665 = pneg %p368
        $region66: #{tpu_custom_call.1} parent=31 // pred_check_branch
          %667 = sbr.rel (%p665) target = $region68
        $region67: #{tpu_custom_call.1} parent=31 // pred_region
          %s668 = sand.u32 %s44, 1
          %s669 = scalar_lea.sflag [#allocation21], %s668
          %s670 = sand.u32 %s358, 1
          %s671 = scalar_lea.vmem [#allocation22], %s670
          %s673 = ssub.s32 16, 16
          %674 = vsyncadd %s669, %s673
          %s675 = smul.addr %s52, 16
          %s676 = scalar_lea.hbm %s12, %s675
          %s678 = sshll.u32 %s671, 4
          %s679 = int_to_ptr.vmem [resolvable:$true] %s678
          %681 = dma.hbm_to_vmem [thread:$0]  %s676, 16, %s679, %s669
        $region68: #{tpu_custom_call.1} parent=31 // pred_fallthru
          _
        // Predicated region
        $region69: #{tpu_custom_call.1} parent=31 // pred_check
          %p682 = pneg %p394
        $region70: #{tpu_custom_call.1} parent=31 // pred_check_branch
          %684 = sbr.rel (%p682) target = $region72
        $region71: #{tpu_custom_call.1} parent=31 // pred_region
          %s685 = sand.u32 %s44, 1
          %s686 = scalar_lea.sflag [#allocation24], %s685
          %s687 = sand.u32 %s384, 1
          %s688 = smul.addr %s687, 32
          %s689 = scalar_lea.vmem [#allocation23], %s688
          %s691 = ssub.s32 512, 512
          %692 = vsyncadd %s686, %s691
          %s693 = smul.addr %s52, 8
          %s694 = smul.addr %s693, 64
          %s695 = scalar_lea.hbm %s13, %s694
          %s696 = sshll.u32 %s689, 4
          %s697 = int_to_ptr.vmem [resolvable:$true] %s696
          %702 = dma.hbm_to_vmem [thread:$0]  %s695, 512, %s697, %s686, 64, 64, 4
        $region72: #{tpu_custom_call.1} parent=31 // pred_fallthru
          _
        // Predicated region
        $region73: #{tpu_custom_call.1} parent=31 // pred_check
          %p703 = pneg %p420
        $region74: #{tpu_custom_call.1} parent=31 // pred_check_branch
          %705 = sbr.rel (%p703) target = $region76
        $region75: #{tpu_custom_call.1} parent=31 // pred_region
          %s706 = sand.u32 %s44, 1
          %s707 = scalar_lea.sflag [#allocation24], %s706
          %s708 = sand.u32 %s410, 1
          %s709 = scalar_lea.vmem [#allocation25], %s708
          %s711 = ssub.s32 16, 16
          %712 = vsyncadd %s707, %s711
          %s713 = smul.addr %s52, 16
          %s714 = scalar_lea.hbm %s14, %s713
          %s716 = sshll.u32 %s709, 4
          %s717 = int_to_ptr.vmem [resolvable:$true] %s716
          %719 = dma.hbm_to_vmem [thread:$0]  %s714, 16, %s717, %s707
        $region76: #{tpu_custom_call.1} parent=31 // pred_fallthru
          _
      $region32: #{tpu_custom_call.1} parent=5 // pred_fallthru
        _
      %p720 = scmp.le.s32.totalorder 1, %s44
      %p721 = scmp.lt.s32.totalorder %s44, 5
      %p722 = pnand %p720, %p721
      %p723 = pneg %p722
      // Predicated region
      $region77: #{tpu_custom_call.1} parent=5 // pred_check
        _
      $region78: #{tpu_custom_call.1} parent=5 // pred_check_branch
        %725 = sbr.rel (%p722) target = $region80
      $region79: #{tpu_custom_call.1} parent=5 // pred_region
        %s726 = ssub.s32 %s44, 1
        %s727 = sand.u32 %s69, 1
        %s728 = scalar_lea.sflag [#allocation3], %s727
        %s729 = sand.u32 %s69, 1
        %s730 = smul.addr %s729, 8
        %s731 = scalar_lea.vmem [#allocation2], %s730
        // Predicated region
        $region81: #{tpu_custom_call.1} parent=79 // pred_check
          %p732 = pneg %p82
        $region82: #{tpu_custom_call.1} parent=79 // pred_check_branch
          %734 = sbr.rel (%p732) target = $region84
        $region83: #{tpu_custom_call.1} parent=79 // pred_region
          %735 = dma.done %s728, 128
        $region84: #{tpu_custom_call.1} parent=79 // pred_fallthru
          _
        %s736 = sand.u32 %s49, 1
        %s737 = scalar_lea.sflag [#allocation6], %s736
        %s738 = sand.u32 %s95, 1
        %s739 = scalar_lea.vmem [#allocation5], %s738
        // Predicated region
        $region85: #{tpu_custom_call.1} parent=79 // pred_check
          %p740 = pneg %p108
        $region86: #{tpu_custom_call.1} parent=79 // pred_check_branch
          %742 = sbr.rel (%p740) target = $region88
        $region87: #{tpu_custom_call.1} parent=79 // pred_region
          %743 = dma.done %s737, 16
        $region88: #{tpu_custom_call.1} parent=79 // pred_fallthru
          _
        %s744 = sand.u32 %s49, 1
        %s745 = scalar_lea.sflag [#allocation6], %s744
        %s746 = sand.u32 %s121, 1
        %s747 = smul.addr %s746, 8
        %s748 = scalar_lea.vmem [#allocation7], %s747
        // Predicated region
        $region89: #{tpu_custom_call.1} parent=79 // pred_check
          %p749 = pneg %p134
        $region90: #{tpu_custom_call.1} parent=79 // pred_check_branch
          %751 = sbr.rel (%p749) target = $region92
        $region91: #{tpu_custom_call.1} parent=79 // pred_region
          %752 = dma.done %s745, 128
        $region92: #{tpu_custom_call.1} parent=79 // pred_fallthru
          _
        // Predicated region
        $region93: #{tpu_custom_call.1} parent=79 // pred_check
          %p753 = pneg %p155
        $region94: #{tpu_custom_call.1} parent=79 // pred_check_branch
          %755 = sbr.rel (%p753) target = $region96
        $region95: #{tpu_custom_call.1} parent=79 // pred_region
          %756 = dma.done [#allocation9], 16
        $region96: #{tpu_custom_call.1} parent=79 // pred_fallthru
          _
        // Predicated region
        $region97: #{tpu_custom_call.1} parent=79 // pred_check
          %p757 = pneg %p176
        $region98: #{tpu_custom_call.1} parent=79 // pred_check_branch
          %759 = sbr.rel (%p757) target = $region100
        $region99: #{tpu_custom_call.1} parent=79 // pred_region
          %760 = dma.done [#allocation9], 16
        $region100: #{tpu_custom_call.1} parent=79 // pred_fallthru
          _
        // Predicated region
        $region101: #{tpu_custom_call.1} parent=79 // pred_check
          %p761 = pneg %p197
        $region102: #{tpu_custom_call.1} parent=79 // pred_check_branch
          %763 = sbr.rel (%p761) target = $region104
        $region103: #{tpu_custom_call.1} parent=79 // pred_region
          %764 = dma.done [#allocation12], 16
        $region104: #{tpu_custom_call.1} parent=79 // pred_fallthru
          _
        // Predicated region
        $region105: #{tpu_custom_call.1} parent=79 // pred_check
          %p765 = pneg %p218
        $region106: #{tpu_custom_call.1} parent=79 // pred_check_branch
          %767 = sbr.rel (%p765) target = $region108
        $region107: #{tpu_custom_call.1} parent=79 // pred_region
          %768 = dma.done [#allocation12], 16
        $region108: #{tpu_custom_call.1} parent=79 // pred_fallthru
          _
        %s769 = sand.u32 %s49, 1
        %s770 = scalar_lea.sflag [#allocation15], %s769
        %s771 = sand.u32 %s231, 1
        %s772 = smul.addr %s771, 16
        %s773 = scalar_lea.vmem [#allocation14], %s772
        // Predicated region
        $region109: #{tpu_custom_call.1} parent=79 // pred_check
          %p774 = pneg %p244
        $region110: #{tpu_custom_call.1} parent=79 // pred_check_branch
          %776 = sbr.rel (%p774) target = $region112
        $region111: #{tpu_custom_call.1} parent=79 // pred_region
          %777 = dma.done %s770, 256
        $region112: #{tpu_custom_call.1} parent=79 // pred_fallthru
          _
        %s778 = sand.u32 %s49, 1
        %s779 = scalar_lea.sflag [#allocation15], %s778
        %s780 = sand.u32 %s257, 1
        %s781 = scalar_lea.vmem [#allocation16], %s780
        // Predicated region
        $region113: #{tpu_custom_call.1} parent=79 // pred_check
          %p782 = pneg %p270
        $region114: #{tpu_custom_call.1} parent=79 // pred_check_branch
          %784 = sbr.rel (%p782) target = $region116
        $region115: #{tpu_custom_call.1} parent=79 // pred_region
          %785 = dma.done %s779, 16
        $region116: #{tpu_custom_call.1} parent=79 // pred_fallthru
          _
        %s786 = sand.u32 %s49, 1
        %s787 = scalar_lea.sflag [#allocation18], %s786
        %s788 = sand.u32 %s283, 1
        %s789 = smul.addr %s788, 16
        %s790 = scalar_lea.vmem [#allocation17], %s789
        // Predicated region
        $region117: #{tpu_custom_call.1} parent=79 // pred_check
          %p791 = pneg %p296
        $region118: #{tpu_custom_call.1} parent=79 // pred_check_branch
          %793 = sbr.rel (%p791) target = $region120
        $region119: #{tpu_custom_call.1} parent=79 // pred_region
          %794 = dma.done %s787, 256
        $region120: #{tpu_custom_call.1} parent=79 // pred_fallthru
          _
        %s795 = sand.u32 %s49, 1
        %s796 = scalar_lea.sflag [#allocation18], %s795
        %s797 = sand.u32 %s309, 1
        %s798 = scalar_lea.vmem [#allocation19], %s797
        // Predicated region
        $region121: #{tpu_custom_call.1} parent=79 // pred_check
          %p799 = pneg %p322
        $region122: #{tpu_custom_call.1} parent=79 // pred_check_branch
          %801 = sbr.rel (%p799) target = $region124
        $region123: #{tpu_custom_call.1} parent=79 // pred_region
          %802 = dma.done %s796, 16
        $region124: #{tpu_custom_call.1} parent=79 // pred_fallthru
          _
        %s803 = sand.u32 %s49, 1
        %s804 = scalar_lea.sflag [#allocation21], %s803
        %s805 = sand.u32 %s335, 1
        %s806 = smul.addr %s805, 16
        %s807 = scalar_lea.vmem [#allocation20], %s806
        // Predicated region
        $region125: #{tpu_custom_call.1} parent=79 // pred_check
          %p808 = pneg %p348
        $region126: #{tpu_custom_call.1} parent=79 // pred_check_branch
          %810 = sbr.rel (%p808) target = $region128
        $region127: #{tpu_custom_call.1} parent=79 // pred_region
          %811 = dma.done %s804, 256
        $region128: #{tpu_custom_call.1} parent=79 // pred_fallthru
          _
        %s812 = sand.u32 %s49, 1
        %s813 = scalar_lea.sflag [#allocation21], %s812
        %s814 = sand.u32 %s361, 1
        %s815 = scalar_lea.vmem [#allocation22], %s814
        // Predicated region
        $region129: #{tpu_custom_call.1} parent=79 // pred_check
          %p816 = pneg %p374
        $region130: #{tpu_custom_call.1} parent=79 // pred_check_branch
          %818 = sbr.rel (%p816) target = $region132
        $region131: #{tpu_custom_call.1} parent=79 // pred_region
          %819 = dma.done %s813, 16
        $region132: #{tpu_custom_call.1} parent=79 // pred_fallthru
          _
        %s820 = sand.u32 %s49, 1
        %s821 = scalar_lea.sflag [#allocation24], %s820
        %s822 = sand.u32 %s387, 1
        %s823 = smul.addr %s822, 32
        %s824 = scalar_lea.vmem [#allocation23], %s823
        // Predicated region
        $region133: #{tpu_custom_call.1} parent=79 // pred_check
          %p825 = pneg %p400
        $region134: #{tpu_custom_call.1} parent=79 // pred_check_branch
          %827 = sbr.rel (%p825) target = $region136
        $region135: #{tpu_custom_call.1} parent=79 // pred_region
          %828 = dma.done %s821, 512
        $region136: #{tpu_custom_call.1} parent=79 // pred_fallthru
          _
        %s829 = sand.u32 %s49, 1
        %s830 = scalar_lea.sflag [#allocation24], %s829
        %s831 = sand.u32 %s413, 1
        %s832 = scalar_lea.vmem [#allocation25], %s831
        // Predicated region
        $region137: #{tpu_custom_call.1} parent=79 // pred_check
          %p833 = pneg %p426
        $region138: #{tpu_custom_call.1} parent=79 // pred_check_branch
          %835 = sbr.rel (%p833) target = $region140
        $region139: #{tpu_custom_call.1} parent=79 // pred_region
          %836 = dma.done %s830, 16
        $region140: #{tpu_custom_call.1} parent=79 // pred_fallthru
          _
        %s837 = sand.u32 %s69, 1
        %s838 = scalar_lea.sflag [#allocation3], %s837
        %s839 = sand.u32 %s69, 1
        %s840 = smul.addr %s839, 8
        %s841 = scalar_lea.vmem [#allocation2], %s840
        %p842 = pneg %p82
        %p843 = pneg %p79
        %s844 = sand.u32 %s49, 1
        %s845 = scalar_lea.sflag [#allocation6], %s844
        %s846 = sand.u32 %s95, 1
        %s847 = scalar_lea.vmem [#allocation5], %s846
        %p848 = pneg %p108
        %p849 = pneg %p105
        %s850 = sand.u32 %s49, 1
        %s851 = scalar_lea.sflag [#allocation6], %s850
        %s852 = sand.u32 %s121, 1
        %s853 = smul.addr %s852, 8
        %s854 = scalar_lea.vmem [#allocation7], %s853
        %p855 = pneg %p134
        %p856 = pneg %p131
        %p857 = pneg %p155
        %p858 = pneg %p152
        %p859 = pneg %p176
        %p860 = pneg %p173
        %p861 = pneg %p197
        %p862 = pneg %p194
        %p863 = pneg %p218
        %p864 = pneg %p215
        %s865 = sand.u32 %s49, 1
        %s866 = scalar_lea.sflag [#allocation15], %s865
        %s867 = sand.u32 %s231, 1
        %s868 = smul.addr %s867, 16
        %s869 = scalar_lea.vmem [#allocation14], %s868
        %p870 = pneg %p244
        %p871 = pneg %p241
        %s872 = sand.u32 %s49, 1
        %s873 = scalar_lea.sflag [#allocation15], %s872
        %s874 = sand.u32 %s257, 1
        %s875 = scalar_lea.vmem [#allocation16], %s874
        %p876 = pneg %p270
        %p877 = pneg %p267
        %s878 = sand.u32 %s49, 1
        %s879 = scalar_lea.sflag [#allocation18], %s878
        %s880 = sand.u32 %s283, 1
        %s881 = smul.addr %s880, 16
        %s882 = scalar_lea.vmem [#allocation17], %s881
        %p883 = pneg %p296
        %p884 = pneg %p293
        %s885 = sand.u32 %s49, 1
        %s886 = scalar_lea.sflag [#allocation18], %s885
        %s887 = sand.u32 %s309, 1
        %s888 = scalar_lea.vmem [#allocation19], %s887
        %p889 = pneg %p322
        %p890 = pneg %p319
        %s891 = sand.u32 %s49, 1
        %s892 = scalar_lea.sflag [#allocation21], %s891
        %s893 = sand.u32 %s335, 1
        %s894 = smul.addr %s893, 16
        %s895 = scalar_lea.vmem [#allocation20], %s894
        %p896 = pneg %p348
        %p897 = pneg %p345
        %s898 = sand.u32 %s49, 1
        %s899 = scalar_lea.sflag [#allocation21], %s898
        %s900 = sand.u32 %s361, 1
        %s901 = scalar_lea.vmem [#allocation22], %s900
        %p902 = pneg %p374
        %p903 = pneg %p371
        %s904 = sand.u32 %s49, 1
        %s905 = scalar_lea.sflag [#allocation24], %s904
        %s906 = sand.u32 %s387, 1
        %s907 = smul.addr %s906, 32
        %s908 = scalar_lea.vmem [#allocation23], %s907
        %p909 = pneg %p400
        %p910 = pneg %p397
        %s911 = sand.u32 %s49, 1
        %s912 = scalar_lea.sflag [#allocation24], %s911
        %s913 = sand.u32 %s413, 1
        %s914 = scalar_lea.vmem [#allocation25], %s913
        %p915 = pneg %p426
        %p916 = pneg %p423
        %p917 = pneg %p452
        %p918 = pneg %p449
        %s919 = sand.u32 %s439, 1
        %s920 = scalar_lea.sflag [#allocation4], %s919
        %s921 = sand.u32 %s439, 1
        %s922 = smul.addr %s921, 8
        %s923 = scalar_lea.vmem [#allocation26], %s922
        %p925 = scmp.eq.s32.totalorder %s54, 0
        // Predicated region
        $region141: #{tpu_custom_call.1} parent=79 // pred_check
          %p926 = pneg %p925
        $region142: #{tpu_custom_call.1} parent=79 // pred_check_branch
          %928 = sbr.rel (%p926) target = $region144
        $region143: #{tpu_custom_call.1} parent=79 // pred_region
          %v929 = vld [vmem:[%s731] sm:$0xff]
          %vm930 = vcmask 261120
          %931 = vst.msk [vmem:[%s923] sm:$0xff] %vm930, %v929
        $region144: #{tpu_custom_call.1} parent=79 // pred_fallthru
          _
        %v932 = vld [vmem:[%s923] sm:$0xff]
        %v933 = vld [vmem:[%s739] sm:$0x1]
        %v934 = vld [vmem:[%s748] sm:$0xff]
        %v935 = vld [vmem:[#allocation8] sm:$0x1]
        %v936 = vld [vmem:[#allocation10] sm:$0x1]
        %vm937 = vcmask 261120
        %v938 = vsel %vm937, %v932, 0.0
        %939 = vadd.xlane.f32.xlu0 %v938
        %v940 = vpop.xlane.xlu0 %939
        %v941 = vrcp.pop 32.0
        %v942 = vmul.f32 %v940, %v941
        %v943 = vsub.f32 %v932, %v942
        %v944 = vmul.f32 %v943, %v943
        %v945 = vsel %vm937, %v944, 0.0
        %946 = vadd.xlane.f32.xlu0 %v945
        %v947 = vpop.xlane.xlu0 %946
        %v948 = vmul.f32 %v947, 0.032258064
        %v949 = vrsqrt.pop %v948
        %v950 = vmul.f32 %v948, %v949
        %vm951 = vcmp.eq.f32.partialorder %v948, inf
        %v952 = vsel %vm951, %v948, %v950
        %vm953 = vcmp.eq.f32.partialorder %v948, 0.0
        %v954 = vand.u32 %v948, 2147483648
        %v955 = vsel %vm953, %v954, %v952
        %v956 = vadd.f32 %v955, 1e-08
        %v957 = vrcp.pop %v956
        %v958 = vmul.f32 %v943, %v957
        %v960 = vlaneseq
        %v961 = vshrl.u32 %v960, 7
        %v962 = vsub.s32 0, %v961
        %v963 = vrot.slane %v935, %v962
        %v965 = vmul.f32 %v963, %v958
        %v967 = vlaneseq
        %v968 = vshrl.u32 %v967, 7
        %v969 = vsub.s32 0, %v968
        %v970 = vrot.slane %v936, %v969
        %v972 = vadd.f32 %v965, %v970
        %v973 = vpack.c.bf16 %v972, %v972
        %v974 = vld [vmem:[%s773] sm:$0xf]
        %v975 = vld [vmem:[%s773 + $0x4] sm:$0xf]
        %v976 = vld [vmem:[%s773 + $0x8] sm:$0xf]
        %v977 = vld [vmem:[%s773 + $0xc] sm:$0xf]
        %v978 = vld [vmem:[%s781] sm:$0x1]
        %v980 = vlaneseq
        %v981 = vshrl.u32 %v980, 7
        %v982 = vsub.s32 0, %v981
        %v983 = vrot.slane %v978, %v982
        %v989 = vunpack.c.l.b16 %v974
        %v990 = vunpack.c.l.b16 %v975
        %v991 = vunpack.c.l.b16 %v976
        %v992 = vunpack.c.l.b16 %v977
        %v993 = vpack.c.b16 %v990, %v989
        %v994 = vpack.c.b16 %v992, %v991
        %v998 = vsel %vm937, %v973, 0
        %1000 = vmatprep.subr.bf16.mxu0 0
        %1001 = vmatpush1.bf16.msra.mxu0 %v993
        %1002 = vmatprep.subr.bf16.mxu0 0
        %1003 = vmatpush1.bf16.msra.mxu0 %v994
        %1004 = vmatprep.subr.bf16.mxu0 0
        %1005 = vmatpush1.bf16.msra.mxu0 0
        %1006 = vmatprep.subr.bf16.mxu0 0
        %1007 = vmatpush1.bf16.msra.mxu0 0
        %1008 = vmatprep.subr.bf16.mxu0 0
        %1009 = vmatpush1.bf16.msra.mxu0 0
        %1010 = vmatprep.subr.bf16.mxu0 0
        %1011 = vmatpush1.bf16.msra.mxu0 0
        %1012 = vmatprep.subr.bf16.mxu0 0
        %1013 = vmatpush1.bf16.msra.mxu0 0
        %1014 = vmatprep.subr.bf16.mxu0 0
        %1015 = vmatpush1.bf16.msra.mxu0 0
        %1016 = vmatprep.subr.bf16.mxu0 0
        %1017 = vmatpush1.bf16.msra.mxu0 0
        %1018 = vmatprep.subr.bf16.mxu0 0
        %1019 = vmatpush1.bf16.msra.mxu0 0
        %1020 = vmatprep.subr.bf16.mxu0 0
        %1021 = vmatpush1.bf16.msra.mxu0 0
        %1022 = vmatprep.subr.bf16.mxu0 0
        %1023 = vmatpush1.bf16.msra.mxu0 0
        %1024 = vmatprep.subr.bf16.mxu0 0
        %1025 = vmatpush1.bf16.msra.mxu0 0
        %1026 = vmatprep.subr.bf16.mxu0 0
        %1027 = vmatpush1.bf16.msra.mxu0 0
        %1028 = vmatprep.subr.bf16.mxu0 0
        %1029 = vmatpush1.bf16.msra.mxu0 0
        %1030 = vmatprep.subr.bf16.mxu0 0
        %1031 = vmatpush1.bf16.msra.mxu0 0
        %1032 = vmatprep.mubr.bf16.mxu0 0
        %1033 = vmatmul.mubr.bf16.gmra.mrb[0].mxu0 %v998
        %v1034 = vpop.f32.mrb[0].mxu0
        %v1035 = vadd.f32 %v983, %v1034
        %v1036 = vpop.f32.mrb[0].mxu0
        %v1037 = vpop.f32.mrb[0].mxu0
        %v1038 = vpop.f32.mrb[0].mxu0
        %1039 = vdwg.mxu0
        %v1040 = vpack.c.bf16 %v1035, %v1035
        %v1042 = vlaneseq
        %v1043 = vshrl.u32 %v1042, 7
        %v1044 = vsub.s32 0, %v1043
        %v1045 = vrot.slane %v933, %v1044
        %1048 = vrot.lane.b32.xlu0 %v1040, 96
        %v1049 = vpop.permute.xlu0 %1048
        %vm1050 = vcmask 64512
        %v1052 = vsel %vm1050, %v1040, 0
        %v1055 = vsel %vm1050, %v1049, 0
        %1057 = vmatprep.subr.bf16.mxu0 0
        %1058 = vmatpush1.bf16.xpose.msra.mxu0 %v1055
        %1059 = vmatprep.subr.bf16.mxu0 0
        %1060 = vmatpush1.bf16.xpose.msra.mxu0 0
        %1061 = vmatprep.subr.bf16.mxu0 0
        %1062 = vmatpush1.bf16.xpose.msra.mxu0 0
        %1063 = vmatprep.subr.bf16.mxu0 0
        %1064 = vmatpush1.bf16.xpose.msra.mxu0 0
        %1065 = vmatprep.subr.bf16.mxu0 0
        %1066 = vmatpush1.bf16.xpose.msra.mxu0 0
        %1067 = vmatprep.subr.bf16.mxu0 0
        %1068 = vmatpush1.bf16.xpose.msra.mxu0 0
        %1069 = vmatprep.subr.bf16.mxu0 0
        %1070 = vmatpush1.bf16.xpose.msra.mxu0 0
        %1071 = vmatprep.subr.bf16.mxu0 0
        %1072 = vmatpush1.bf16.xpose.msra.mxu0 0
        %1073 = vmatprep.subr.bf16.mxu0 0
        %1074 = vmatpush1.bf16.xpose.msra.mxu0 0
        %1075 = vmatprep.subr.bf16.mxu0 0
        %1076 = vmatpush1.bf16.xpose.msra.mxu0 0
        %1077 = vmatprep.subr.bf16.mxu0 0
        %1078 = vmatpush1.bf16.xpose.msra.mxu0 0
        %1079 = vmatprep.subr.bf16.mxu0 0
        %1080 = vmatpush1.bf16.xpose.msra.mxu0 0
        %1081 = vmatprep.subr.bf16.mxu0 0
        %1082 = vmatpush1.bf16.xpose.msra.mxu0 0
        %1083 = vmatprep.subr.bf16.mxu0 0
        %1084 = vmatpush1.bf16.xpose.msra.mxu0 0
        %1085 = vmatprep.subr.bf16.mxu0 0
        %1086 = vmatpush1.bf16.xpose.msra.mxu0 0
        %1087 = vmatprep.subr.bf16.mxu0 0
        %1088 = vmatpush1.bf16.xpose.msra.mxu0 0
        %1089 = vmatprep.mubr.bf16.mxu0 0
        %1090 = vmatmul.mubr.bf16.gmra.mrb[0].mxu0 %v1052
        %v1091 = vpop.f32.mrb[0].mxu0
        %v1092 = vadd.f32 %v1045, %v1091
        %v1093 = vpop.f32.mrb[0].mxu0
        %v1094 = vpop.f32.mrb[0].mxu0
        %v1095 = vpop.f32.mrb[0].mxu0
        %1096 = vdwg.mxu0
        %v1097 = vsel %vm1050, %v1092, -inf
        %1098 = vmax.xlane.f32.xlu0 %v1097
        %v1099 = vpop.xlane.xlu0 %1098
        %v1100 = vsub.f32 %v1092, %v1099
        %v1101 = vmul.f32 %v1100, 1.442695
        %v1102 = vpow.pop %v1101
        %v1103 = vsel %vm1050, %v1102, 0.0
        %1104 = vadd.xlane.f32.xlu0 %v1103
        %v1105 = vpop.xlane.xlu0 %1104
        %v1106 = vrcp.pop %v1105
        %v1107 = vmul.f32 %v1102, %v1106
        %v1108 = vpack.c.bf16 %v1107, %v1107
        %1109 = vrot.lane.b32.xlu0 %v1040, 64
        %v1110 = vpop.permute.xlu0 %1109
        %v1112 = vsel %vm1050, %v1108, 0
        %vm1114 = vcmask 1043456
        %v1116 = vsel %vm1114, %v1110, 0
        %1118 = vmatprep.subr.bf16.mxu0 0
        %1119 = vmatpush1.bf16.msra.mxu0 %v1116
        %1120 = vmatprep.subr.bf16.mxu0 0
        %1121 = vmatpush1.bf16.msra.mxu0 0
        %1122 = vmatprep.subr.bf16.mxu0 0
        %1123 = vmatpush1.bf16.msra.mxu0 0
        %1124 = vmatprep.subr.bf16.mxu0 0
        %1125 = vmatpush1.bf16.msra.mxu0 0
        %1126 = vmatprep.subr.bf16.mxu0 0
        %1127 = vmatpush1.bf16.msra.mxu0 0
        %1128 = vmatprep.subr.bf16.mxu0 0
        %1129 = vmatpush1.bf16.msra.mxu0 0
        %1130 = vmatprep.subr.bf16.mxu0 0
        %1131 = vmatpush1.bf16.msra.mxu0 0
        %1132 = vmatprep.subr.bf16.mxu0 0
        %1133 = vmatpush1.bf16.msra.mxu0 0
        %1134 = vmatprep.subr.bf16.mxu0 0
        %1135 = vmatpush1.bf16.msra.mxu0 0
        %1136 = vmatprep.subr.bf16.mxu0 0
        %1137 = vmatpush1.bf16.msra.mxu0 0
        %1138 = vmatprep.subr.bf16.mxu0 0
        %1139 = vmatpush1.bf16.msra.mxu0 0
        %1140 = vmatprep.subr.bf16.mxu0 0
        %1141 = vmatpush1.bf16.msra.mxu0 0
        %1142 = vmatprep.subr.bf16.mxu0 0
        %1143 = vmatpush1.bf16.msra.mxu0 0
        %1144 = vmatprep.subr.bf16.mxu0 0
        %1145 = vmatpush1.bf16.msra.mxu0 0
        %1146 = vmatprep.subr.bf16.mxu0 0
        %1147 = vmatpush1.bf16.msra.mxu0 0
        %1148 = vmatprep.subr.bf16.mxu0 0
        %1149 = vmatpush1.bf16.msra.mxu0 0
        %1150 = vmatprep.mubr.bf16.mxu0 0
        %1151 = vmatmul.mubr.bf16.gmra.mrb[0].mxu0 %v1112
        %v1152 = vpop.f32.mrb[0].mxu0
        %v1153 = vadd.f32 0.0, %v1152
        %v1154 = vpop.f32.mrb[0].mxu0
        %v1155 = vpop.f32.mrb[0].mxu0
        %v1156 = vpop.f32.mrb[0].mxu0
        %1157 = vdwg.mxu0
        %v1158 = vpack.c.bf16 %v1153, %v1153
        %v1159 = vld [vmem:[%s790] sm:$0xf]
        %1160 = vrot.lane.b32.xlu0 %v1040, 120
        %v1161 = vpop.permute.xlu0 %1160
        %1162 = vrot.lane.b32.xlu0 %v1040, 88
        %v1163 = vpop.permute.xlu0 %1162
        %v1165 = vsel %vm1050, %v1161, 0
        %v1168 = vsel %vm1050, %v1163, 0
        %1170 = vmatprep.subr.bf16.mxu0 0
        %1171 = vmatpush1.bf16.xpose.msra.mxu0 %v1168
        %1172 = vmatprep.subr.bf16.mxu0 0
        %1173 = vmatpush1.bf16.xpose.msra.mxu0 0
        %1174 = vmatprep.subr.bf16.mxu0 0
        %1175 = vmatpush1.bf16.xpose.msra.mxu0 0
        %1176 = vmatprep.subr.bf16.mxu0 0
        %1177 = vmatpush1.bf16.xpose.msra.mxu0 0
        %1178 = vmatprep.subr.bf16.mxu0 0
        %1179 = vmatpush1.bf16.xpose.msra.mxu0 0
        %1180 = vmatprep.subr.bf16.mxu0 0
        %1181 = vmatpush1.bf16.xpose.msra.mxu0 0
        %1182 = vmatprep.subr.bf16.mxu0 0
        %1183 = vmatpush1.bf16.xpose.msra.mxu0 0
        %1184 = vmatprep.subr.bf16.mxu0 0
        %1185 = vmatpush1.bf16.xpose.msra.mxu0 0
        %1186 = vmatprep.subr.bf16.mxu0 0
        %1187 = vmatpush1.bf16.xpose.msra.mxu0 0
        %1188 = vmatprep.subr.bf16.mxu0 0
        %1189 = vmatpush1.bf16.xpose.msra.mxu0 0
        %1190 = vmatprep.subr.bf16.mxu0 0
        %1191 = vmatpush1.bf16.xpose.msra.mxu0 0
        %1192 = vmatprep.subr.bf16.mxu0 0
        %1193 = vmatpush1.bf16.xpose.msra.mxu0 0
        %1194 = vmatprep.subr.bf16.mxu0 0
        %1195 = vmatpush1.bf16.xpose.msra.mxu0 0
        %1196 = vmatprep.subr.bf16.mxu0 0
        %1197 = vmatpush1.bf16.xpose.msra.mxu0 0
        %1198 = vmatprep.subr.bf16.mxu0 0
        %1199 = vmatpush1.bf16.xpose.msra.mxu0 0
        %1200 = vmatprep.subr.bf16.mxu0 0
        %1201 = vmatpush1.bf16.xpose.msra.mxu0 0
        %1202 = vmatprep.mubr.bf16.mxu0 0
        %1203 = vmatmul.mubr.bf16.gmra.mrb[0].mxu0 %v1165
        %v1204 = vpop.f32.mrb[0].mxu0
        %v1205 = vadd.f32 %v1045, %v1204
        %v1206 = vpop.f32.mrb[0].mxu0
        %v1207 = vpop.f32.mrb[0].mxu0
        %v1208 = vpop.f32.mrb[0].mxu0
        %1209 = vdwg.mxu0
        %v1210 = vsel %vm1050, %v1205, -inf
        %1211 = vmax.xlane.f32.xlu0 %v1210
        %v1212 = vpop.xlane.xlu0 %1211
        %v1213 = vsub.f32 %v1205, %v1212
        %v1214 = vmul.f32 %v1213, 1.442695
        %v1215 = vpow.pop %v1214
        %v1216 = vsel %vm1050, %v1215, 0.0
        %1217 = vadd.xlane.f32.xlu0 %v1216
        %v1218 = vpop.xlane.xlu0 %1217
        %v1219 = vrcp.pop %v1218
        %v1220 = vmul.f32 %v1215, %v1219
        %v1221 = vpack.c.bf16 %v1220, %v1220
        %1222 = vrot.lane.b32.xlu0 %v1040, 56
        %v1223 = vpop.permute.xlu0 %1222
        %v1225 = vsel %vm1050, %v1221, 0
        %v1228 = vsel %vm1114, %v1223, 0
        %1230 = vmatprep.subr.bf16.mxu0 0
        %1231 = vmatpush1.bf16.msra.mxu0 %v1228
        %1232 = vmatprep.subr.bf16.mxu0 0
        %1233 = vmatpush1.bf16.msra.mxu0 0
        %1234 = vmatprep.subr.bf16.mxu0 0
        %1235 = vmatpush1.bf16.msra.mxu0 0
        %1236 = vmatprep.subr.bf16.mxu0 0
        %1237 = vmatpush1.bf16.msra.mxu0 0
        %1238 = vmatprep.subr.bf16.mxu0 0
        %1239 = vmatpush1.bf16.msra.mxu0 0
        %1240 = vmatprep.subr.bf16.mxu0 0
        %1241 = vmatpush1.bf16.msra.mxu0 0
        %1242 = vmatprep.subr.bf16.mxu0 0
        %1243 = vmatpush1.bf16.msra.mxu0 0
        %1244 = vmatprep.subr.bf16.mxu0 0
        %1245 = vmatpush1.bf16.msra.mxu0 0
        %1246 = vmatprep.subr.bf16.mxu0 0
        %1247 = vmatpush1.bf16.msra.mxu0 0
        %1248 = vmatprep.subr.bf16.mxu0 0
        %1249 = vmatpush1.bf16.msra.mxu0 0
        %1250 = vmatprep.subr.bf16.mxu0 0
        %1251 = vmatpush1.bf16.msra.mxu0 0
        %1252 = vmatprep.subr.bf16.mxu0 0
        %1253 = vmatpush1.bf16.msra.mxu0 0
        %1254 = vmatprep.subr.bf16.mxu0 0
        %1255 = vmatpush1.bf16.msra.mxu0 0
        %1256 = vmatprep.subr.bf16.mxu0 0
        %1257 = vmatpush1.bf16.msra.mxu0 0
        %1258 = vmatprep.subr.bf16.mxu0 0
        %1259 = vmatpush1.bf16.msra.mxu0 0
        %1260 = vmatprep.subr.bf16.mxu0 0
        %1261 = vmatpush1.bf16.msra.mxu0 0
        %1262 = vmatprep.mubr.bf16.mxu0 0
        %1263 = vmatmul.mubr.bf16.gmra.mrb[0].mxu0 %v1225
        %v1264 = vpop.f32.mrb[0].mxu0
        %v1265 = vadd.f32 0.0, %v1264
        %v1266 = vpop.f32.mrb[0].mxu0
        %v1267 = vpop.f32.mrb[0].mxu0
        %v1268 = vpop.f32.mrb[0].mxu0
        %1269 = vdwg.mxu0
        %v1270 = vpack.c.bf16 %v1265, %v1265
        %s1271 = scalar_lea.vmem %s790, 4 [#allocation17]
        %v1272 = vld [vmem:[%s1271] sm:$0xf]
        %v1274 = vsel %vm1050, %v1270, 0
        %v1277 = vsel %vm1114, %v1272, 0
        %1279 = vmatprep.subr.bf16.mxu0 0
        %1280 = vmatpush1.bf16.msra.mxu0 %v1277
        %1281 = vmatprep.subr.bf16.mxu0 0
        %1282 = vmatpush1.bf16.msra.mxu0 0
        %1283 = vmatprep.subr.bf16.mxu0 0
        %1284 = vmatpush1.bf16.msra.mxu0 0
        %1285 = vmatprep.subr.bf16.mxu0 0
        %1286 = vmatpush1.bf16.msra.mxu0 0
        %1287 = vmatprep.subr.bf16.mxu0 0
        %1288 = vmatpush1.bf16.msra.mxu0 0
        %1289 = vmatprep.subr.bf16.mxu0 0
        %1290 = vmatpush1.bf16.msra.mxu0 0
        %1291 = vmatprep.subr.bf16.mxu0 0
        %1292 = vmatpush1.bf16.msra.mxu0 0
        %1293 = vmatprep.subr.bf16.mxu0 0
        %1294 = vmatpush1.bf16.msra.mxu0 0
        %1295 = vmatprep.subr.bf16.mxu0 0
        %1296 = vmatpush1.bf16.msra.mxu0 0
        %1297 = vmatprep.subr.bf16.mxu0 0
        %1298 = vmatpush1.bf16.msra.mxu0 0
        %1299 = vmatprep.subr.bf16.mxu0 0
        %1300 = vmatpush1.bf16.msra.mxu0 0
        %1301 = vmatprep.subr.bf16.mxu0 0
        %1302 = vmatpush1.bf16.msra.mxu0 0
        %1303 = vmatprep.subr.bf16.mxu0 0
        %1304 = vmatpush1.bf16.msra.mxu0 0
        %1305 = vmatprep.subr.bf16.mxu0 0
        %1306 = vmatpush1.bf16.msra.mxu0 0
        %1307 = vmatprep.subr.bf16.mxu0 0
        %1308 = vmatpush1.bf16.msra.mxu0 0
        %1309 = vmatprep.subr.bf16.mxu0 0
        %1310 = vmatpush1.bf16.msra.mxu0 0
        %1311 = vmatprep.mubr.bf16.mxu0 0
        %1312 = vmatmul.mubr.bf16.gmra.mrb[0].mxu0 %v1274
        %v1313 = vpop.f32.mrb[0].mxu0
        %v1314 = vadd.f32 0.0, %v1313
        %v1315 = vpop.f32.mrb[0].mxu0
        %v1316 = vpop.f32.mrb[0].mxu0
        %v1317 = vpop.f32.mrb[0].mxu0
        %1318 = vdwg.mxu0
        %v1320 = vsel %vm1050, %v1158, 0
        %v1323 = vsel %vm1114, %v1159, 0
        %1325 = vmatprep.subr.bf16.mxu0 0
        %1326 = vmatpush1.bf16.msra.mxu0 %v1323
        %1327 = vmatprep.subr.bf16.mxu0 0
        %1328 = vmatpush1.bf16.msra.mxu0 0
        %1329 = vmatprep.subr.bf16.mxu0 0
        %1330 = vmatpush1.bf16.msra.mxu0 0
        %1331 = vmatprep.subr.bf16.mxu0 0
        %1332 = vmatpush1.bf16.msra.mxu0 0
        %1333 = vmatprep.subr.bf16.mxu0 0
        %1334 = vmatpush1.bf16.msra.mxu0 0
        %1335 = vmatprep.subr.bf16.mxu0 0
        %1336 = vmatpush1.bf16.msra.mxu0 0
        %1337 = vmatprep.subr.bf16.mxu0 0
        %1338 = vmatpush1.bf16.msra.mxu0 0
        %1339 = vmatprep.subr.bf16.mxu0 0
        %1340 = vmatpush1.bf16.msra.mxu0 0
        %1341 = vmatprep.subr.bf16.mxu0 0
        %1342 = vmatpush1.bf16.msra.mxu0 0
        %1343 = vmatprep.subr.bf16.mxu0 0
        %1344 = vmatpush1.bf16.msra.mxu0 0
        %1345 = vmatprep.subr.bf16.mxu0 0
        %1346 = vmatpush1.bf16.msra.mxu0 0
        %1347 = vmatprep.subr.bf16.mxu0 0
        %1348 = vmatpush1.bf16.msra.mxu0 0
        %1349 = vmatprep.subr.bf16.mxu0 0
        %1350 = vmatpush1.bf16.msra.mxu0 0
        %1351 = vmatprep.subr.bf16.mxu0 0
        %1352 = vmatpush1.bf16.msra.mxu0 0
        %1353 = vmatprep.subr.bf16.mxu0 0
        %1354 = vmatpush1.bf16.msra.mxu0 0
        %1355 = vmatprep.subr.bf16.mxu0 0
        %1356 = vmatpush1.bf16.msra.mxu0 0
        %1357 = vmatprep.mubr.bf16.mxu0 0
        %1358 = vmatmul.mubr.bf16.gmra.mrb[0].mxu0 %v1320
        %v1359 = vpop.f32.mrb[0].mxu0
        %v1360 = vadd.f32 %v1314, %v1359
        %v1361 = vpop.f32.mrb[0].mxu0
        %v1362 = vpop.f32.mrb[0].mxu0
        %v1363 = vpop.f32.mrb[0].mxu0
        %1364 = vdwg.mxu0
        %1365 = vrot.lane.b32.xlu0 %v1040, 112
        %v1366 = vpop.permute.xlu0 %1365
        %1367 = vrot.lane.b32.xlu0 %v1040, 80
        %v1368 = vpop.permute.xlu0 %1367
        %v1370 = vsel %vm1050, %v1366, 0
        %v1373 = vsel %vm1050, %v1368, 0
        %1375 = vmatprep.subr.bf16.mxu0 0
        %1376 = vmatpush1.bf16.xpose.msra.mxu0 %v1373
        %1377 = vmatprep.subr.bf16.mxu0 0
        %1378 = vmatpush1.bf16.xpose.msra.mxu0 0
        %1379 = vmatprep.subr.bf16.mxu0 0
        %1380 = vmatpush1.bf16.xpose.msra.mxu0 0
        %1381 = vmatprep.subr.bf16.mxu0 0
        %1382 = vmatpush1.bf16.xpose.msra.mxu0 0
        %1383 = vmatprep.subr.bf16.mxu0 0
        %1384 = vmatpush1.bf16.xpose.msra.mxu0 0
        %1385 = vmatprep.subr.bf16.mxu0 0
        %1386 = vmatpush1.bf16.xpose.msra.mxu0 0
        %1387 = vmatprep.subr.bf16.mxu0 0
        %1388 = vmatpush1.bf16.xpose.msra.mxu0 0
        %1389 = vmatprep.subr.bf16.mxu0 0
        %1390 = vmatpush1.bf16.xpose.msra.mxu0 0
        %1391 = vmatprep.subr.bf16.mxu0 0
        %1392 = vmatpush1.bf16.xpose.msra.mxu0 0
        %1393 = vmatprep.subr.bf16.mxu0 0
        %1394 = vmatpush1.bf16.xpose.msra.mxu0 0
        %1395 = vmatprep.subr.bf16.mxu0 0
        %1396 = vmatpush1.bf16.xpose.msra.mxu0 0
        %1397 = vmatprep.subr.bf16.mxu0 0
        %1398 = vmatpush1.bf16.xpose.msra.mxu0 0
        %1399 = vmatprep.subr.bf16.mxu0 0
        %1400 = vmatpush1.bf16.xpose.msra.mxu0 0
        %1401 = vmatprep.subr.bf16.mxu0 0
        %1402 = vmatpush1.bf16.xpose.msra.mxu0 0
        %1403 = vmatprep.subr.bf16.mxu0 0
        %1404 = vmatpush1.bf16.xpose.msra.mxu0 0
        %1405 = vmatprep.subr.bf16.mxu0 0
        %1406 = vmatpush1.bf16.xpose.msra.mxu0 0
        %1407 = vmatprep.mubr.bf16.mxu0 0
        %1408 = vmatmul.mubr.bf16.gmra.mrb[0].mxu0 %v1370
        %v1409 = vpop.f32.mrb[0].mxu0
        %v1410 = vadd.f32 %v1045, %v1409
        %v1411 = vpop.f32.mrb[0].mxu0
        %v1412 = vpop.f32.mrb[0].mxu0
        %v1413 = vpop.f32.mrb[0].mxu0
        %1414 = vdwg.mxu0
        %v1415 = vsel %vm1050, %v1410, -inf
        %1416 = vmax.xlane.f32.xlu0 %v1415
        %v1417 = vpop.xlane.xlu0 %1416
        %v1418 = vsub.f32 %v1410, %v1417
        %v1419 = vmul.f32 %v1418, 1.442695
        %v1420 = vpow.pop %v1419
        %v1421 = vsel %vm1050, %v1420, 0.0
        %1422 = vadd.xlane.f32.xlu0 %v1421
        %v1423 = vpop.xlane.xlu0 %1422
        %v1424 = vrcp.pop %v1423
        %v1425 = vmul.f32 %v1420, %v1424
        %v1426 = vpack.c.bf16 %v1425, %v1425
        %1427 = vrot.lane.b32.xlu0 %v1040, 48
        %v1428 = vpop.permute.xlu0 %1427
        %v1430 = vsel %vm1050, %v1426, 0
        %v1433 = vsel %vm1114, %v1428, 0
        %1435 = vmatprep.subr.bf16.mxu0 0
        %1436 = vmatpush1.bf16.msra.mxu0 %v1433
        %1437 = vmatprep.subr.bf16.mxu0 0
        %1438 = vmatpush1.bf16.msra.mxu0 0
        %1439 = vmatprep.subr.bf16.mxu0 0
        %1440 = vmatpush1.bf16.msra.mxu0 0
        %1441 = vmatprep.subr.bf16.mxu0 0
        %1442 = vmatpush1.bf16.msra.mxu0 0
        %1443 = vmatprep.subr.bf16.mxu0 0
        %1444 = vmatpush1.bf16.msra.mxu0 0
        %1445 = vmatprep.subr.bf16.mxu0 0
        %1446 = vmatpush1.bf16.msra.mxu0 0
        %1447 = vmatprep.subr.bf16.mxu0 0
        %1448 = vmatpush1.bf16.msra.mxu0 0
        %1449 = vmatprep.subr.bf16.mxu0 0
        %1450 = vmatpush1.bf16.msra.mxu0 0
        %1451 = vmatprep.subr.bf16.mxu0 0
        %1452 = vmatpush1.bf16.msra.mxu0 0
        %1453 = vmatprep.subr.bf16.mxu0 0
        %1454 = vmatpush1.bf16.msra.mxu0 0
        %1455 = vmatprep.subr.bf16.mxu0 0
        %1456 = vmatpush1.bf16.msra.mxu0 0
        %1457 = vmatprep.subr.bf16.mxu0 0
        %1458 = vmatpush1.bf16.msra.mxu0 0
        %1459 = vmatprep.subr.bf16.mxu0 0
        %1460 = vmatpush1.bf16.msra.mxu0 0
        %1461 = vmatprep.subr.bf16.mxu0 0
        %1462 = vmatpush1.bf16.msra.mxu0 0
        %1463 = vmatprep.subr.bf16.mxu0 0
        %1464 = vmatpush1.bf16.msra.mxu0 0
        %1465 = vmatprep.subr.bf16.mxu0 0
        %1466 = vmatpush1.bf16.msra.mxu0 0
        %1467 = vmatprep.mubr.bf16.mxu0 0
        %1468 = vmatmul.mubr.bf16.gmra.mrb[0].mxu0 %v1430
        %v1469 = vpop.f32.mrb[0].mxu0
        %v1470 = vadd.f32 0.0, %v1469
        %v1471 = vpop.f32.mrb[0].mxu0
        %v1472 = vpop.f32.mrb[0].mxu0
        %v1473 = vpop.f32.mrb[0].mxu0
        %1474 = vdwg.mxu0
        %v1475 = vpack.c.bf16 %v1470, %v1470
        %s1476 = scalar_lea.vmem %s790, 8 [#allocation17]
        %v1477 = vld [vmem:[%s1476] sm:$0xf]
        %v1479 = vsel %vm1050, %v1475, 0
        %v1482 = vsel %vm1114, %v1477, 0
        %1484 = vmatprep.subr.bf16.mxu0 0
        %1485 = vmatpush1.bf16.msra.mxu0 %v1482
        %1486 = vmatprep.subr.bf16.mxu0 0
        %1487 = vmatpush1.bf16.msra.mxu0 0
        %1488 = vmatprep.subr.bf16.mxu0 0
        %1489 = vmatpush1.bf16.msra.mxu0 0
        %1490 = vmatprep.subr.bf16.mxu0 0
        %1491 = vmatpush1.bf16.msra.mxu0 0
        %1492 = vmatprep.subr.bf16.mxu0 0
        %1493 = vmatpush1.bf16.msra.mxu0 0
        %1494 = vmatprep.subr.bf16.mxu0 0
        %1495 = vmatpush1.bf16.msra.mxu0 0
        %1496 = vmatprep.subr.bf16.mxu0 0
        %1497 = vmatpush1.bf16.msra.mxu0 0
        %1498 = vmatprep.subr.bf16.mxu0 0
        %1499 = vmatpush1.bf16.msra.mxu0 0
        %1500 = vmatprep.subr.bf16.mxu0 0
        %1501 = vmatpush1.bf16.msra.mxu0 0
        %1502 = vmatprep.subr.bf16.mxu0 0
        %1503 = vmatpush1.bf16.msra.mxu0 0
        %1504 = vmatprep.subr.bf16.mxu0 0
        %1505 = vmatpush1.bf16.msra.mxu0 0
        %1506 = vmatprep.subr.bf16.mxu0 0
        %1507 = vmatpush1.bf16.msra.mxu0 0
        %1508 = vmatprep.subr.bf16.mxu0 0
        %1509 = vmatpush1.bf16.msra.mxu0 0
        %1510 = vmatprep.subr.bf16.mxu0 0
        %1511 = vmatpush1.bf16.msra.mxu0 0
        %1512 = vmatprep.subr.bf16.mxu0 0
        %1513 = vmatpush1.bf16.msra.mxu0 0
        %1514 = vmatprep.subr.bf16.mxu0 0
        %1515 = vmatpush1.bf16.msra.mxu0 0
        %1516 = vmatprep.mubr.bf16.mxu0 0
        %1517 = vmatmul.mubr.bf16.gmra.mrb[0].mxu0 %v1479
        %v1518 = vpop.f32.mrb[0].mxu0
        %v1519 = vadd.f32 0.0, %v1518
        %v1520 = vpop.f32.mrb[0].mxu0
        %v1521 = vpop.f32.mrb[0].mxu0
        %v1522 = vpop.f32.mrb[0].mxu0
        %1523 = vdwg.mxu0
        %v1524 = vadd.f32 %v1360, %v1519
        %1525 = vrot.lane.b32.xlu0 %v1040, 104
        %v1526 = vpop.permute.xlu0 %1525
        %1527 = vrot.lane.b32.xlu0 %v1040, 72
        %v1528 = vpop.permute.xlu0 %1527
        %v1530 = vsel %vm1050, %v1526, 0
        %v1533 = vsel %vm1050, %v1528, 0
        %1535 = vmatprep.subr.bf16.mxu0 0
        %1536 = vmatpush1.bf16.xpose.msra.mxu0 %v1533
        %1537 = vmatprep.subr.bf16.mxu0 0
        %1538 = vmatpush1.bf16.xpose.msra.mxu0 0
        %1539 = vmatprep.subr.bf16.mxu0 0
        %1540 = vmatpush1.bf16.xpose.msra.mxu0 0
        %1541 = vmatprep.subr.bf16.mxu0 0
        %1542 = vmatpush1.bf16.xpose.msra.mxu0 0
        %1543 = vmatprep.subr.bf16.mxu0 0
        %1544 = vmatpush1.bf16.xpose.msra.mxu0 0
        %1545 = vmatprep.subr.bf16.mxu0 0
        %1546 = vmatpush1.bf16.xpose.msra.mxu0 0
        %1547 = vmatprep.subr.bf16.mxu0 0
        %1548 = vmatpush1.bf16.xpose.msra.mxu0 0
        %1549 = vmatprep.subr.bf16.mxu0 0
        %1550 = vmatpush1.bf16.xpose.msra.mxu0 0
        %1551 = vmatprep.subr.bf16.mxu0 0
        %1552 = vmatpush1.bf16.xpose.msra.mxu0 0
        %1553 = vmatprep.subr.bf16.mxu0 0
        %1554 = vmatpush1.bf16.xpose.msra.mxu0 0
        %1555 = vmatprep.subr.bf16.mxu0 0
        %1556 = vmatpush1.bf16.xpose.msra.mxu0 0
        %1557 = vmatprep.subr.bf16.mxu0 0
        %1558 = vmatpush1.bf16.xpose.msra.mxu0 0
        %1559 = vmatprep.subr.bf16.mxu0 0
        %1560 = vmatpush1.bf16.xpose.msra.mxu0 0
        %1561 = vmatprep.subr.bf16.mxu0 0
        %1562 = vmatpush1.bf16.xpose.msra.mxu0 0
        %1563 = vmatprep.subr.bf16.mxu0 0
        %1564 = vmatpush1.bf16.xpose.msra.mxu0 0
        %1565 = vmatprep.subr.bf16.mxu0 0
        %1566 = vmatpush1.bf16.xpose.msra.mxu0 0
        %1567 = vmatprep.mubr.bf16.mxu0 0
        %1568 = vmatmul.mubr.bf16.gmra.mrb[0].mxu0 %v1530
        %v1569 = vpop.f32.mrb[0].mxu0
        %v1570 = vadd.f32 %v1045, %v1569
        %v1571 = vpop.f32.mrb[0].mxu0
        %v1572 = vpop.f32.mrb[0].mxu0
        %v1573 = vpop.f32.mrb[0].mxu0
        %1574 = vdwg.mxu0
        %v1575 = vsel %vm1050, %v1570, -inf
        %1576 = vmax.xlane.f32.xlu0 %v1575
        %v1577 = vpop.xlane.xlu0 %1576
        %v1578 = vsub.f32 %v1570, %v1577
        %v1579 = vmul.f32 %v1578, 1.442695
        %v1580 = vpow.pop %v1579
        %v1581 = vsel %vm1050, %v1580, 0.0
        %1582 = vadd.xlane.f32.xlu0 %v1581
        %v1583 = vpop.xlane.xlu0 %1582
        %v1584 = vrcp.pop %v1583
        %v1585 = vmul.f32 %v1580, %v1584
        %v1586 = vpack.c.bf16 %v1585, %v1585
        %1587 = vrot.lane.b32.xlu0 %v1040, 40
        %v1588 = vpop.permute.xlu0 %1587
        %v1590 = vsel %vm1050, %v1586, 0
        %v1593 = vsel %vm1114, %v1588, 0
        %1595 = vmatprep.subr.bf16.mxu0 0
        %1596 = vmatpush1.bf16.msra.mxu0 %v1593
        %1597 = vmatprep.subr.bf16.mxu0 0
        %1598 = vmatpush1.bf16.msra.mxu0 0
        %1599 = vmatprep.subr.bf16.mxu0 0
        %1600 = vmatpush1.bf16.msra.mxu0 0
        %1601 = vmatprep.subr.bf16.mxu0 0
        %1602 = vmatpush1.bf16.msra.mxu0 0
        %1603 = vmatprep.subr.bf16.mxu0 0
        %1604 = vmatpush1.bf16.msra.mxu0 0
        %1605 = vmatprep.subr.bf16.mxu0 0
        %1606 = vmatpush1.bf16.msra.mxu0 0
        %1607 = vmatprep.subr.bf16.mxu0 0
        %1608 = vmatpush1.bf16.msra.mxu0 0
        %1609 = vmatprep.subr.bf16.mxu0 0
        %1610 = vmatpush1.bf16.msra.mxu0 0
        %1611 = vmatprep.subr.bf16.mxu0 0
        %1612 = vmatpush1.bf16.msra.mxu0 0
        %1613 = vmatprep.subr.bf16.mxu0 0
        %1614 = vmatpush1.bf16.msra.mxu0 0
        %1615 = vmatprep.subr.bf16.mxu0 0
        %1616 = vmatpush1.bf16.msra.mxu0 0
        %1617 = vmatprep.subr.bf16.mxu0 0
        %1618 = vmatpush1.bf16.msra.mxu0 0
        %1619 = vmatprep.subr.bf16.mxu0 0
        %1620 = vmatpush1.bf16.msra.mxu0 0
        %1621 = vmatprep.subr.bf16.mxu0 0
        %1622 = vmatpush1.bf16.msra.mxu0 0
        %1623 = vmatprep.subr.bf16.mxu0 0
        %1624 = vmatpush1.bf16.msra.mxu0 0
        %1625 = vmatprep.subr.bf16.mxu0 0
        %1626 = vmatpush1.bf16.msra.mxu0 0
        %1627 = vmatprep.mubr.bf16.mxu0 0
        %1628 = vmatmul.mubr.bf16.gmra.mrb[0].mxu0 %v1590
        %v1629 = vpop.f32.mrb[0].mxu0
        %v1630 = vadd.f32 0.0, %v1629
        %v1631 = vpop.f32.mrb[0].mxu0
        %v1632 = vpop.f32.mrb[0].mxu0
        %v1633 = vpop.f32.mrb[0].mxu0
        %1634 = vdwg.mxu0
        %v1635 = vpack.c.bf16 %v1630, %v1630
        %s1636 = scalar_lea.vmem %s790, 12 [#allocation17]
        %v1637 = vld [vmem:[%s1636] sm:$0xf]
        %v1639 = vsel %vm1050, %v1635, 0
        %v1642 = vsel %vm1114, %v1637, 0
        %1644 = vmatprep.subr.bf16.mxu0 0
        %1645 = vmatpush1.bf16.msra.mxu0 %v1642
        %1646 = vmatprep.subr.bf16.mxu0 0
        %1647 = vmatpush1.bf16.msra.mxu0 0
        %1648 = vmatprep.subr.bf16.mxu0 0
        %1649 = vmatpush1.bf16.msra.mxu0 0
        %1650 = vmatprep.subr.bf16.mxu0 0
        %1651 = vmatpush1.bf16.msra.mxu0 0
        %1652 = vmatprep.subr.bf16.mxu0 0
        %1653 = vmatpush1.bf16.msra.mxu0 0
        %1654 = vmatprep.subr.bf16.mxu0 0
        %1655 = vmatpush1.bf16.msra.mxu0 0
        %1656 = vmatprep.subr.bf16.mxu0 0
        %1657 = vmatpush1.bf16.msra.mxu0 0
        %1658 = vmatprep.subr.bf16.mxu0 0
        %1659 = vmatpush1.bf16.msra.mxu0 0
        %1660 = vmatprep.subr.bf16.mxu0 0
        %1661 = vmatpush1.bf16.msra.mxu0 0
        %1662 = vmatprep.subr.bf16.mxu0 0
        %1663 = vmatpush1.bf16.msra.mxu0 0
        %1664 = vmatprep.subr.bf16.mxu0 0
        %1665 = vmatpush1.bf16.msra.mxu0 0
        %1666 = vmatprep.subr.bf16.mxu0 0
        %1667 = vmatpush1.bf16.msra.mxu0 0
        %1668 = vmatprep.subr.bf16.mxu0 0
        %1669 = vmatpush1.bf16.msra.mxu0 0
        %1670 = vmatprep.subr.bf16.mxu0 0
        %1671 = vmatpush1.bf16.msra.mxu0 0
        %1672 = vmatprep.subr.bf16.mxu0 0
        %1673 = vmatpush1.bf16.msra.mxu0 0
        %1674 = vmatprep.subr.bf16.mxu0 0
        %1675 = vmatpush1.bf16.msra.mxu0 0
        %1676 = vmatprep.mubr.bf16.mxu0 0
        %1677 = vmatmul.mubr.bf16.gmra.mrb[0].mxu0 %v1639
        %v1678 = vpop.f32.mrb[0].mxu0
        %v1679 = vadd.f32 0.0, %v1678
        %v1680 = vpop.f32.mrb[0].mxu0
        %v1681 = vpop.f32.mrb[0].mxu0
        %v1682 = vpop.f32.mrb[0].mxu0
        %1683 = vdwg.mxu0
        %v1684 = vadd.f32 %v1524, %v1679
        %1686 = vset.pattern.permute.xlu0 0
        %1687 = vperm.xlu0 %1686, %v934
        %v1688 = vpop.permute.xlu0 %1687
        %v1690 = vmul.f32 %v1684, %v1688
        %v1691 = vld [vmem:[%s798] sm:$0x1]
        %v1693 = vlaneseq
        %v1694 = vshrl.u32 %v1693, 7
        %v1695 = vsub.s32 0, %v1694
        %v1696 = vrot.slane %v1691, %v1695
        %v1698 = vadd.f32 %v1690, %v1696
        %v1699 = vadd.f32 %v932, %v1698
        %v1700 = vld [vmem:[#allocation11] sm:$0x1]
        %v1701 = vld [vmem:[#allocation13] sm:$0x1]
        %v1702 = vsel %vm937, %v1699, 0.0
        %1703 = vadd.xlane.f32.xlu0 %v1702
        %v1704 = vpop.xlane.xlu0 %1703
        %v1705 = vmul.f32 %v1704, %v941
        %v1706 = vsub.f32 %v1699, %v1705
        %v1707 = vmul.f32 %v1706, %v1706
        %v1708 = vsel %vm937, %v1707, 0.0
        %1709 = vadd.xlane.f32.xlu0 %v1708
        %v1710 = vpop.xlane.xlu0 %1709
        %v1711 = vmul.f32 %v1710, 0.032258064
        %v1712 = vrsqrt.pop %v1711
        %v1713 = vmul.f32 %v1711, %v1712
        %vm1714 = vcmp.eq.f32.partialorder %v1711, inf
        %v1715 = vsel %vm1714, %v1711, %v1713
        %vm1716 = vcmp.eq.f32.partialorder %v1711, 0.0
        %v1717 = vand.u32 %v1711, 2147483648
        %v1718 = vsel %vm1716, %v1717, %v1715
        %v1719 = vadd.f32 %v1718, 1e-08
        %v1720 = vrcp.pop %v1719
        %v1721 = vmul.f32 %v1706, %v1720
        %v1723 = vlaneseq
        %v1724 = vshrl.u32 %v1723, 7
        %v1725 = vsub.s32 0, %v1724
        %v1726 = vrot.slane %v1700, %v1725
        %v1728 = vmul.f32 %v1726, %v1721
        %v1730 = vlaneseq
        %v1731 = vshrl.u32 %v1730, 7
        %v1732 = vsub.s32 0, %v1731
        %v1733 = vrot.slane %v1701, %v1732
        %v1735 = vadd.f32 %v1728, %v1733
        %v1736 = vpack.c.bf16 %v1735, %v1735
        %v1737 = vld [vmem:[%s807] sm:$0xf]
        %v1738 = vld [vmem:[%s807 + $0x4] sm:$0xf]
        %v1739 = vld [vmem:[%s807 + $0x8] sm:$0xf]
        %v1740 = vld [vmem:[%s807 + $0xc] sm:$0xf]
        %v1741 = vld [vmem:[%s815] sm:$0x1]
        %v1743 = vlaneseq
        %v1744 = vshrl.u32 %v1743, 7
        %v1745 = vsub.s32 0, %v1744
        %v1746 = vrot.slane %v1741, %v1745
        %v1752 = vunpack.c.l.b16 %v1737
        %v1753 = vunpack.c.l.b16 %v1738
        %v1754 = vunpack.c.l.b16 %v1739
        %v1755 = vunpack.c.l.b16 %v1740
        %v1756 = vpack.c.b16 %v1753, %v1752
        %v1757 = vpack.c.b16 %v1755, %v1754
        %v1761 = vsel %vm937, %v1736, 0
        %1763 = vmatprep.subr.bf16.mxu0 0
        %1764 = vmatpush1.bf16.msra.mxu0 %v1756
        %1765 = vmatprep.subr.bf16.mxu0 0
        %1766 = vmatpush1.bf16.msra.mxu0 %v1757
        %1767 = vmatprep.subr.bf16.mxu0 0
        %1768 = vmatpush1.bf16.msra.mxu0 0
        %1769 = vmatprep.subr.bf16.mxu0 0
        %1770 = vmatpush1.bf16.msra.mxu0 0
        %1771 = vmatprep.subr.bf16.mxu0 0
        %1772 = vmatpush1.bf16.msra.mxu0 0
        %1773 = vmatprep.subr.bf16.mxu0 0
        %1774 = vmatpush1.bf16.msra.mxu0 0
        %1775 = vmatprep.subr.bf16.mxu0 0
        %1776 = vmatpush1.bf16.msra.mxu0 0
        %1777 = vmatprep.subr.bf16.mxu0 0
        %1778 = vmatpush1.bf16.msra.mxu0 0
        %1779 = vmatprep.subr.bf16.mxu0 0
        %1780 = vmatpush1.bf16.msra.mxu0 0
        %1781 = vmatprep.subr.bf16.mxu0 0
        %1782 = vmatpush1.bf16.msra.mxu0 0
        %1783 = vmatprep.subr.bf16.mxu0 0
        %1784 = vmatpush1.bf16.msra.mxu0 0
        %1785 = vmatprep.subr.bf16.mxu0 0
        %1786 = vmatpush1.bf16.msra.mxu0 0
        %1787 = vmatprep.subr.bf16.mxu0 0
        %1788 = vmatpush1.bf16.msra.mxu0 0
        %1789 = vmatprep.subr.bf16.mxu0 0
        %1790 = vmatpush1.bf16.msra.mxu0 0
        %1791 = vmatprep.subr.bf16.mxu0 0
        %1792 = vmatpush1.bf16.msra.mxu0 0
        %1793 = vmatprep.subr.bf16.mxu0 0
        %1794 = vmatpush1.bf16.msra.mxu0 0
        %1795 = vmatprep.mubr.bf16.mxu0 0
        %1796 = vmatmul.mubr.bf16.gmra.mrb[0].mxu0 %v1761
        %v1797 = vpop.f32.mrb[0].mxu0
        %v1798 = vadd.f32 %v1746, %v1797
        %v1799 = vpop.f32.mrb[0].mxu0
        %v1800 = vpop.f32.mrb[0].mxu0
        %v1801 = vpop.f32.mrb[0].mxu0
        %1802 = vdwg.mxu0
        %v1803 = vmax.f32 %v1798, 0.0
        %v1804 = vpack.c.bf16 %v1803, %v1803
        %v1805 = vld [vmem:[%s824] sm:$0xf]
        %v1806 = vld [vmem:[%s824 + $0x4] sm:$0xf]
        %v1807 = vld [vmem:[%s824 + $0x8] sm:$0xf]
        %v1808 = vld [vmem:[%s824 + $0xc] sm:$0xf]
        %v1809 = vld [vmem:[%s824 + $0x10] sm:$0xf]
        %v1810 = vld [vmem:[%s824 + $0x14] sm:$0xf]
        %v1811 = vld [vmem:[%s824 + $0x18] sm:$0xf]
        %v1812 = vld [vmem:[%s824 + $0x1c] sm:$0xf]
        %v1813 = vld [vmem:[%s832] sm:$0x1]
        %v1815 = vlaneseq
        %v1816 = vshrl.u32 %v1815, 7
        %v1817 = vsub.s32 0, %v1816
        %v1818 = vrot.slane %v1813, %v1817
        %v1828 = vunpack.c.l.b16 %v1805
        %v1829 = vunpack.c.l.b16 %v1806
        %v1830 = vunpack.c.l.b16 %v1807
        %v1831 = vunpack.c.l.b16 %v1808
        %v1832 = vunpack.c.l.b16 %v1809
        %v1833 = vunpack.c.l.b16 %v1810
        %v1834 = vunpack.c.l.b16 %v1811
        %v1835 = vunpack.c.l.b16 %v1812
        %v1836 = vpack.c.b16 %v1829, %v1828
        %v1837 = vpack.c.b16 %v1831, %v1830
        %v1838 = vpack.c.b16 %v1833, %v1832
        %v1839 = vpack.c.b16 %v1835, %v1834
        %vm1844 = vcmask 523264
        %v1846 = vsel %vm1844, %v1804, 0
        %1848 = vmatprep.subr.bf16.mxu0 0
        %1849 = vmatpush1.bf16.msra.mxu0 %v1836
        %1850 = vmatprep.subr.bf16.mxu0 0
        %1851 = vmatpush1.bf16.msra.mxu0 %v1837
        %1852 = vmatprep.subr.bf16.mxu0 0
        %1853 = vmatpush1.bf16.msra.mxu0 %v1838
        %1854 = vmatprep.subr.bf16.mxu0 0
        %1855 = vmatpush1.bf16.msra.mxu0 %v1839
        %1856 = vmatprep.subr.bf16.mxu0 0
        %1857 = vmatpush1.bf16.msra.mxu0 0
        %1858 = vmatprep.subr.bf16.mxu0 0
        %1859 = vmatpush1.bf16.msra.mxu0 0
        %1860 = vmatprep.subr.bf16.mxu0 0
        %1861 = vmatpush1.bf16.msra.mxu0 0
        %1862 = vmatprep.subr.bf16.mxu0 0
        %1863 = vmatpush1.bf16.msra.mxu0 0
        %1864 = vmatprep.subr.bf16.mxu0 0
        %1865 = vmatpush1.bf16.msra.mxu0 0
        %1866 = vmatprep.subr.bf16.mxu0 0
        %1867 = vmatpush1.bf16.msra.mxu0 0
        %1868 = vmatprep.subr.bf16.mxu0 0
        %1869 = vmatpush1.bf16.msra.mxu0 0
        %1870 = vmatprep.subr.bf16.mxu0 0
        %1871 = vmatpush1.bf16.msra.mxu0 0
        %1872 = vmatprep.subr.bf16.mxu0 0
        %1873 = vmatpush1.bf16.msra.mxu0 0
        %1874 = vmatprep.subr.bf16.mxu0 0
        %1875 = vmatpush1.bf16.msra.mxu0 0
        %1876 = vmatprep.subr.bf16.mxu0 0
        %1877 = vmatpush1.bf16.msra.mxu0 0
        %1878 = vmatprep.subr.bf16.mxu0 0
        %1879 = vmatpush1.bf16.msra.mxu0 0
        %1880 = vmatprep.mubr.bf16.mxu0 0
        %1881 = vmatmul.mubr.bf16.gmra.mrb[0].mxu0 %v1846
        %v1882 = vpop.f32.mrb[0].mxu0
        %v1883 = vadd.f32 %v1818, %v1882
        %v1884 = vpop.f32.mrb[0].mxu0
        %v1885 = vpop.f32.mrb[0].mxu0
        %v1886 = vpop.f32.mrb[0].mxu0
        %1887 = vdwg.mxu0
        %v1888 = vadd.f32 %v1699, %v1883
        %1889 = vst.msk [vmem:[%s923] sm:$0xff] %vm937, %v1888
        %s1890 = sand.u32 %s439, 1
        %s1891 = scalar_lea.sflag [#allocation4], %s1890
        %s1892 = sand.u32 %s439, 1
        %s1893 = smul.addr %s1892, 8
        %s1894 = scalar_lea.vmem [#allocation26], %s1893
        // Predicated region
        $region145: #{tpu_custom_call.1} parent=79 // pred_check
          %p1895 = pneg %p449
        $region146: #{tpu_custom_call.1} parent=79 // pred_check_branch
          %1897 = sbr.rel (%p1895) target = $region148
        $region147: #{tpu_custom_call.1} parent=79 // pred_region
          %s1899 = ssub.s32 128, 128
          %1900 = vsyncadd %s1891, %s1899
          %s1901 = smul.addr %s53, 128
          %s1902 = scalar_lea.hbm %s15, %s1901
          %s1904 = sshll.u32 %s1894, 4
          %s1905 = int_to_ptr.vmem [resolvable:$true] %s1904
          %1907 = dma.vmem_to_hbm [thread:$0]  %s1905, 128, %s1902, %s1891
        $region148: #{tpu_custom_call.1} parent=79 // pred_fallthru
          _
      $region80: #{tpu_custom_call.1} parent=5 // pred_fallthru
        _
      %p1908 = scmp.le.s32.totalorder 2, %s44
      // Predicated region
      $region149: #{tpu_custom_call.1} parent=5 // pred_check
        %p1909 = pneg %p1908
      $region150: #{tpu_custom_call.1} parent=5 // pred_check_branch
        %1911 = sbr.rel (%p1909) target = $region152
      $region151: #{tpu_custom_call.1} parent=5 // pred_region
        %s1912 = ssub.s32 %s44, 2
        // Predicated region
        $region153: #{tpu_custom_call.1} parent=151 // pred_check
          %p1913 = pneg %p455
        $region154: #{tpu_custom_call.1} parent=151 // pred_check_branch
          %1915 = sbr.rel (%p1913) target = $region156
        $region155: #{tpu_custom_call.1} parent=151 // pred_region
          %s1916 = sand.u32 %s440, 1
          %s1917 = scalar_lea.sflag [#allocation4], %s1916
          %s1918 = sand.u32 %s440, 1
          %s1919 = smul.addr %s1918, 8
          %s1920 = scalar_lea.vmem [#allocation26], %s1919
          %1921 = dma.done %s1917, 128
        $region156: #{tpu_custom_call.1} parent=151 // pred_fallthru
          _
      $region152: #{tpu_custom_call.1} parent=5 // pred_fallthru
        _
    $region6: #{tpu_custom_call.1} parent=1 // loop_footer
      %s48 = sadd.s32 1, %s44
    $region7: #{tpu_custom_call.1} parent=1 // loop_footer_branch
      %43 = sbr.rel target = $region3
    $region8: #{tpu_custom_call.1} parent=1 // loop_exit
      _
    %1922 = vsyncpa [#allocation3], 1
    %s1923 = scalar_lea.sflag [#allocation3], 1
    %1924 = vsyncpa %s1923, 1
    %1925 = vsyncpa [#allocation6], 1
    %s1926 = scalar_lea.sflag [#allocation6], 1
    %1927 = vsyncpa %s1926, 1
    %1928 = vsyncpa [#allocation9], 1
    %1929 = vsyncpa [#allocation12], 1
    %1930 = vsyncpa [#allocation15], 1
    %s1931 = scalar_lea.sflag [#allocation15], 1
    %1932 = vsyncpa %s1931, 1
    %1933 = vsyncpa [#allocation18], 1
    %s1934 = scalar_lea.sflag [#allocation18], 1
    %1935 = vsyncpa %s1934, 1
    %1936 = vsyncpa [#allocation21], 1
    %s1937 = scalar_lea.sflag [#allocation21], 1
    %1938 = vsyncpa %s1937, 1
    %1939 = vsyncpa [#allocation24], 1
    %s1940 = scalar_lea.sflag [#allocation24], 1
    %1941 = vsyncpa %s1940, 1
    %1942 = vsyncpa [#allocation4], 1
    %s1943 = scalar_lea.sflag [#allocation4], 1
    %1944 = vsyncpa %s1943, 1

</llo_original>
